<compile_context>
chip_gen: v7x
topology: tpu7x:2x2x1
jax: 0.10.0
libtpu: 0.0.40
codegen_flags: <defaults>
</compile_context>

<pallas_src>
import functools
import math

import jax
import jax.numpy as jnp
from jax.experimental import pallas as pl
from jax.experimental.pallas import tpu as pltpu


def _layernorm(x, gamma, beta, eps=1e-5):
    # x: (T, D) f32, gamma/beta: (1, D); biased variance like torch.nn.LayerNorm
    mean = jnp.mean(x, axis=-1, keepdims=True)
    var = jnp.mean((x - mean) ** 2, axis=-1, keepdims=True)
    inv = jax.lax.rsqrt(var + eps)
    return (x - mean) * inv * gamma + beta


def encoder_kernel(
    x_ref,
    wq_ref, bq_ref, wk_ref, bk_ref, wv_ref, bv_ref,
    wo_ref, bo_ref,
    g1_ref, be1_ref,
    w1_ref, b1_ref, w2_ref, b2_ref,
    g2_ref, be2_ref,
    out_ref, score_ref,
    acc_ref,
    *, q: int, causal: bool,
):
    hh = pl.program_id(1)                     # head index (inner, "arbitrary")
    n_heads = pl.num_programs(1)

    x = x_ref[0]                              # (T, D) f32  (fetched once per batch element)
    T = x.shape[0]
    x_bf = x.astype(jnp.bfloat16)

    # ---- Per-head Q/K/V projections (bf16 operands, f32 accumulation) ----
    Qh = jnp.dot(x_bf, wq_ref[0], preferred_element_type=jnp.float32) + bq_ref[0]   # (T, q)
    Kh = jnp.dot(x_bf, wk_ref[0], preferred_element_type=jnp.float32) + bk_ref[0]   # (T, q)
    Vh = jnp.dot(x_bf, wv_ref[0], preferred_element_type=jnp.float32) + bv_ref[0]   # (T, v)

    # ---- Attention scores for this head: single live (T, T) f32 buffer ----
    s = jnp.einsum(
        "tq,sq->ts", Qh.astype(jnp.bfloat16), Kh.astype(jnp.bfloat16),
        preferred_element_type=jnp.float32,
    ) * jnp.float32(1.0 / math.sqrt(q))

    if causal:
        row = jax.lax.broadcasted_iota(jnp.int32, (T, T), 0)
        col = jax.lax.broadcasted_iota(jnp.int32, (T, T), 1)
        s = jnp.where(col <= row, s, jnp.float32(-jnp.inf))

    # Numerically-stable softmax with EXACT division (torch.softmax parity for the score).
    s = jnp.exp(s - jnp.max(s, axis=-1, keepdims=True))
    p = s / jnp.sum(s, axis=-1, keepdims=True)

    # Per-head score store, already in the torch-facing (h, B, T, T) layout.
    score_ref[0, 0] = p.astype(score_ref.dtype)

    # ---- Context + this head's contribution to the output projection ----
    ctx = jnp.dot(p.astype(jnp.bfloat16), Vh.astype(jnp.bfloat16),
                  preferred_element_type=jnp.float32)                 # (T, v)
    proj = jnp.dot(ctx.astype(jnp.bfloat16), wo_ref[0],
                   preferred_element_type=jnp.float32)                # (T, D)

    @pl.when(hh == 0)
    def _():
        acc_ref[...] = jnp.zeros_like(acc_ref)

    acc_ref[...] += proj

    # ---- Epilogue (residual + LN + FFN + residual + LN) once, on the last head ----
    @pl.when(hh == n_heads - 1)
    def _():
        mha = acc_ref[...] + bo_ref[...]
        # dropout (inference) == identity
        x1 = _layernorm(mha + x, g1_ref[...], be1_ref[...])

        ff = jnp.dot(x1.astype(jnp.bfloat16), w1_ref[...],
                     preferred_element_type=jnp.float32) + b1_ref[...]
        ff = jnp.maximum(ff, 0.0)              # ReLU
        ff = jnp.dot(ff.astype(jnp.bfloat16), w2_ref[...],
                     preferred_element_type=jnp.float32) + b2_ref[...]

        # dropout (inference) == identity
        out_ref[0] = _layernorm(ff + x1, g2_ref[...], be2_ref[...])


def encoder_forward(x, params, *, q, v, h, mask=False, stage="test",
                    score_dtype=jnp.float32):
    """x: (B, T, D) float32. Returns (out (B,T,D) f32, score (h*B, T, T) score_dtype)."""
    B, T, D = x.shape
    d_hidden = params["w1"].shape[1]
    causal = bool(mask) and (stage == "train")

    # Split projection weights per head in the wrapper (one-time cost) so the kernel never
    # needs XLU head transposes.  Matmul weights pre-cast to bf16 (halves weight DMA, native
    # MXU path); biases / LayerNorm params stay f32.
    def split_w(w, dh):   # (D_in, h*dh) -> (h, D_in, dh); head i == columns [i*dh:(i+1)*dh]
        return w.reshape(w.shape[0], h, dh).transpose(1, 0, 2)

    def split_b(b, dh):   # (1, h*dh) -> (h, 1, dh)
        return b.reshape(1, h, dh).transpose(1, 0, 2)

    wq_h = split_w(params["wq"], q).astype(jnp.bfloat16)
    wk_h = split_w(params["wk"], q).astype(jnp.bfloat16)
    wv_h = split_w(params["wv"], v).astype(jnp.bfloat16)
    bq_h = split_b(params["bq"], q).astype(jnp.float32)
    bk_h = split_b(params["bk"], q).astype(jnp.float32)
    bv_h = split_b(params["bv"], v).astype(jnp.float32)
    wo_h = params["wo"].reshape(h, v, D).astype(jnp.bfloat16)   # head i == rows [i*v:(i+1)*v]

    head_params = [wq_h, bq_h, wk_h, bk_h, wv_h, bv_h, wo_h]
    full_params = [
        params["bo"].astype(jnp.float32),
        params["g1"], params["be1"],
        params["w1"].astype(jnp.bfloat16), params["b1"],
        params["w2"].astype(jnp.bfloat16), params["b2"],
        params["g2"], params["be2"],
    ]
    plist = head_params + full_params

    def head_spec(p):      # block = one head's slice, indexed by the head grid axis
        return pl.BlockSpec((1,) + p.shape[1:], lambda b, hh: (hh, 0, 0))

    def full_spec(p):      # fully resident, constant block index (fetched once)
        nd = p.ndim
        return pl.BlockSpec(p.shape, lambda b, hh, _nd=nd: (0,) * _nd)

    in_specs = (
        [pl.BlockSpec((1, T, D), lambda b, hh: (b, 0, 0))]
        + [head_spec(p) for p in head_params]
        + [full_spec(p) for p in full_params]
    )

    # ---- Scoped-VMEM budget from the actual per-step working set (with headroom) ----
    score_itemsize = jnp.dtype(score_dtype).itemsize
    param_block_bytes = (
        sum(p.size // h * p.dtype.itemsize for p in head_params)
        + sum(p.size * p.dtype.itemsize for p in full_params)
    )
    block_bytes = 2 * (                 # double-buffered pipeline blocks
        T * D * 4                       # x block
        + T * D * 4                     # out block
        + T * T * score_itemsize        # per-head score block
        + param_block_bytes
    )
    temp_bytes = (3 * T * T * 4 + T * (2 * q + v) * 4 + T * d_hidden * 4 + 6 * T * D * 4)
    vmem_limit = int(min(64 * 1024 * 1024,
                         max(32 * 1024 * 1024, 2 * (block_bytes + temp_bytes))))

    kernel = functools.partial(encoder_kernel, q=q, causal=causal)

    out, score = pl.pallas_call(
        kernel,
        out_shape=(
            jax.ShapeDtypeStruct((B, T, D), jnp.float32),
            # Emitted directly in the torch-facing head-major layout -> no post-kernel transpose.
            jax.ShapeDtypeStruct((h, B, T, T), score_dtype),
        ),
        grid=(B, h),
        in_specs=in_specs,
        out_specs=(
            pl.BlockSpec((1, T, D), lambda b, hh: (b, 0, 0)),
            pl.BlockSpec((1, 1, T, T), lambda b, hh: (hh, b, 0, 0)),
        ),
        scratch_shapes=[pltpu.VMEM((T, D), jnp.float32)],   # per-batch MHA accumulator
        compiler_params=pltpu.CompilerParams(
            # batch elements are independent -> megacore sharding on v7x;
            # head axis carries the accumulator -> "arbitrary".
            dimension_semantics=("parallel", "arbitrary"),
            vmem_limit_bytes=vmem_limit,
        ),
    )(x, *plist)

    # (h, B, T, T) -> (h*B, T, T): free merge of leading dims; matches torch's
    # torch.cat(chunk(..., h, dim=-1), dim=0) head-major ordering.
    return out, score.reshape(h * B, T, T)


def encoder_reference(x, params, *, q, v, h, causal):
    """Pure-JAX f32 reference matching the PyTorch module (eval-mode dropout)."""
    B, T, D = x.shape

    def ln(z, g, b, eps=1e-5):
        m = jnp.mean(z, axis=-1, keepdims=True)
        var = jnp.mean((z - m) ** 2, axis=-1, keepdims=True)
        return (z - m) * jax.lax.rsqrt(var + eps) * g + b

    Q = x @ params["wq"] + params["bq"]
    K = x @ params["wk"] + params["bk"]
    V = x @ params["wv"] + params["bv"]
    Qh = Q.reshape(B, T, h, q).transpose(2, 0, 1, 3)
    Kh = K.reshape(B, T, h, q).transpose(2, 0, 1, 3)
    Vh = V.reshape(B, T, h, v).transpose(2, 0, 1, 3)
    s = jnp.einsum("hbtq,hbsq->hbts", Qh, Kh) / math.sqrt(q)
    if causal:
        tri = jnp.tril(jnp.ones((T, T), bool))
        s = jnp.where(tri, s, -jnp.inf)
    p = jax.nn.softmax(s, axis=-1)
    ctx = jnp.einsum("hbts,hbsv->hbtv", p, Vh)
    att = ctx.transpose(1, 2, 0, 3).reshape(B, T, h * v)
    mha = att @ params["wo"] + params["bo"]
    x1 = ln(mha + x, params["g1"], params["be1"])
    ff = jnp.maximum(x1 @ params["w1"] + params["b1"], 0.0) @ params["w2"] + params["b2"]
    out = ln(ff + x1, params["g2"], params["be2"])
    return out, p.reshape(h * B, T, T)


def init_params(key, d_model, d_hidden, q, v, h):
    ks = jax.random.split(key, 8)
    scale = 0.02

    def lin(k, din, dout):
        return scale * jax.random.normal(k, (din, dout), jnp.float32)

    return {
        "wq": lin(ks[0], d_model, q * h), "bq": jnp.zeros((1, q * h), jnp.float32),
        "wk": lin(ks[1], d_model, q * h), "bk": jnp.zeros((1, q * h), jnp.float32),
        "wv": lin(ks[2], d_model, v * h), "bv": jnp.zeros((1, v * h), jnp.float32),
        "wo": lin(ks[3], v * h, d_model), "bo": jnp.zeros((1, d_model), jnp.float32),
        "g1": jnp.ones((1, d_model), jnp.float32), "be1": jnp.zeros((1, d_model), jnp.float32),
        "w1": lin(ks[4], d_model, d_hidden), "b1": jnp.zeros((1, d_hidden), jnp.float32),
        "w2": lin(ks[5], d_hidden, d_model), "b2": jnp.zeros((1, d_model), jnp.float32),
        "g2": jnp.ones((1, d_model), jnp.float32), "be2": jnp.zeros((1, d_model), jnp.float32),
    }


if __name__ == "__main__":
    # Small, module-consistent shapes.
    B, T = 2, 8
    d_model, d_hidden = 32, 64
    q, v, h = 8, 8, 4

    key = jax.random.PRNGKey(0)
    kx, kp = jax.random.split(key)
    x = jax.random.normal(kx, (B, T, d_model), jnp.float32)
    params = init_params(kp, d_model, d_hidden, q, v, h)

    # TODO(synk): dropout is stochastic in train mode; implemented here with eval (identity) semantics.
    out, score = encoder_forward(x, params, q=q, v=v, h=h, mask=False, stage="test")
    jax.block_until_ready((out, score))

    assert out.shape == (B, T, d_model)
    assert score.shape == (h * B, T, T)
    assert bool(jnp.all(jnp.isfinite(out))) and bool(jnp.all(jnp.isfinite(score)))

    out_exp, score_exp = encoder_reference(x, params, q=q, v=v, h=h, causal=False)
    assert bool(jnp.allclose(out, out_exp, atol=5e-2, rtol=5e-2)), (
        f"out max abs err {float(jnp.max(jnp.abs(out - out_exp)))}")
    assert bool(jnp.allclose(score, score_exp, atol=1e-2, rtol=1e-2)), (
        f"score max abs err {float(jnp.max(jnp.abs(score - score_exp)))}")

    print("KERNEL_OK")
</pallas_src>

<mosaic_0001>
module attributes {stable_mosaic.version = 11 : i64} {
  func.func @encoder_kernel(%arg0: i32, %arg1: i32, %arg2: memref<1x8x32xf32, #tpu.memory_space<vmem>>, %arg3: memref<1x32x8xbf16, #tpu.memory_space<vmem>>, %arg4: memref<1x1x8xf32, #tpu.memory_space<vmem>>, %arg5: memref<1x32x8xbf16, #tpu.memory_space<vmem>>, %arg6: memref<1x1x8xf32, #tpu.memory_space<vmem>>, %arg7: memref<1x32x8xbf16, #tpu.memory_space<vmem>>, %arg8: memref<1x1x8xf32, #tpu.memory_space<vmem>>, %arg9: memref<1x8x32xbf16, #tpu.memory_space<vmem>>, %arg10: memref<1x32xf32, #tpu.memory_space<vmem>>, %arg11: memref<1x32xf32, #tpu.memory_space<vmem>>, %arg12: memref<1x32xf32, #tpu.memory_space<vmem>>, %arg13: memref<32x64xbf16, #tpu.memory_space<vmem>>, %arg14: memref<1x64xf32, #tpu.memory_space<vmem>>, %arg15: memref<64x32xbf16, #tpu.memory_space<vmem>>, %arg16: memref<1x32xf32, #tpu.memory_space<vmem>>, %arg17: memref<1x32xf32, #tpu.memory_space<vmem>>, %arg18: memref<1x32xf32, #tpu.memory_space<vmem>>, %arg19: memref<1x8x32xf32, #tpu.memory_space<vmem>>, %arg20: memref<1x1x8x8xf32, #tpu.memory_space<vmem>>, %arg21: memref<8x32xf32, #tpu.memory_space<vmem>>) attributes {dimension_semantics = [#tpu.dimension_semantics<parallel>, #tpu.dimension_semantics<arbitrary>], iteration_bounds = array<i64: 2, 4>, scalar_prefetch = 0 : i64, scratch_operands = 1 : i64, tpu.core_type = #tpu.core_type<tc>, window_params = [{transform_indices = @transform_0, window_bounds = array<i64: 1, 8, 32>}, {transform_indices = @transform_1, window_bounds = array<i64: 1, 32, 8>}, {transform_indices = @transform_2, window_bounds = array<i64: 1, 1, 8>}, {transform_indices = @transform_3, window_bounds = array<i64: 1, 32, 8>}, {transform_indices = @transform_4, window_bounds = array<i64: 1, 1, 8>}, {transform_indices = @transform_5, window_bounds = array<i64: 1, 32, 8>}, {transform_indices = @transform_6, window_bounds = array<i64: 1, 1, 8>}, {transform_indices = @transform_7, window_bounds = array<i64: 1, 8, 32>}, {pipeline_mode = #tpu.pipeline_mode<synchronous>, transform_indices = @transform_8, window_bounds = array<i64: 1, 32>}, {pipeline_mode = #tpu.pipeline_mode<synchronous>, transform_indices = @transform_9, window_bounds = array<i64: 1, 32>}, {pipeline_mode = #tpu.pipeline_mode<synchronous>, transform_indices = @transform_10, window_bounds = array<i64: 1, 32>}, {pipeline_mode = #tpu.pipeline_mode<synchronous>, transform_indices = @transform_11, window_bounds = array<i64: 32, 64>}, {pipeline_mode = #tpu.pipeline_mode<synchronous>, transform_indices = @transform_12, window_bounds = array<i64: 1, 64>}, {pipeline_mode = #tpu.pipeline_mode<synchronous>, transform_indices = @transform_13, window_bounds = array<i64: 64, 32>}, {pipeline_mode = #tpu.pipeline_mode<synchronous>, transform_indices = @transform_14, window_bounds = array<i64: 1, 32>}, {pipeline_mode = #tpu.pipeline_mode<synchronous>, transform_indices = @transform_15, window_bounds = array<i64: 1, 32>}, {pipeline_mode = #tpu.pipeline_mode<synchronous>, transform_indices = @transform_16, window_bounds = array<i64: 1, 32>}, {transform_indices = @transform_17, window_bounds = array<i64: 1, 8, 32>}, {transform_indices = @transform_18, window_bounds = array<i64: 1, 1, 8, 8>}]} {
    %c0 = arith.constant 0 : index
    %c0_0 = arith.constant 0 : index
    %c0_1 = arith.constant 0 : index
    %0 = vector.load %arg2[%c0, %c0_0, %c0_1] : memref<1x8x32xf32, #tpu.memory_space<vmem>>, vector<1x8x32xf32>
    %1 = vector.shape_cast %0 : vector<1x8x32xf32> to vector<8x32xf32>
    %2 = arith.truncf %1 : vector<8x32xf32> to vector<8x32xbf16>
    %c0_2 = arith.constant 0 : index
    %c0_3 = arith.constant 0 : index
    %c0_4 = arith.constant 0 : index
    %3 = vector.load %arg3[%c0_2, %c0_3, %c0_4] : memref<1x32x8xbf16, #tpu.memory_space<vmem>>, vector<1x32x8xbf16>
    %4 = vector.shape_cast %3 : vector<1x32x8xbf16> to vector<32x8xbf16>
    %cst = arith.constant dense<0.000000e+00> : vector<8x8xf32>
    %5 = tpu.matmul %2, %4, %cst {dimension_numbers = #tpu.dot_dimension_numbers<[1], [0], [0], [1], [0, 0, 1, 1], [], []>} : vector<8x32xbf16>, vector<32x8xbf16>, vector<8x8xf32> -> vector<8x8xf32>
    %c0_5 = arith.constant 0 : index
    %c0_6 = arith.constant 0 : index
    %c0_7 = arith.constant 0 : index
    %6 = vector.load %arg4[%c0_5, %c0_6, %c0_7] : memref<1x1x8xf32, #tpu.memory_space<vmem>>, vector<1x1x8xf32>
    %7 = vector.shape_cast %6 : vector<1x1x8xf32> to vector<1x8xf32>
    %8 = vector.broadcast %7 : vector<1x8xf32> to vector<8x8xf32>
    %9 = arith.addf %5, %8 : vector<8x8xf32>
    %c0_8 = arith.constant 0 : index
    %c0_9 = arith.constant 0 : index
    %c0_10 = arith.constant 0 : index
    %10 = vector.load %arg5[%c0_8, %c0_9, %c0_10] : memref<1x32x8xbf16, #tpu.memory_space<vmem>>, vector<1x32x8xbf16>
    %11 = vector.shape_cast %10 : vector<1x32x8xbf16> to vector<32x8xbf16>
    %cst_11 = arith.constant dense<0.000000e+00> : vector<8x8xf32>
    %12 = tpu.matmul %2, %11, %cst_11 {dimension_numbers = #tpu.dot_dimension_numbers<[1], [0], [0], [1], [0, 0, 1, 1], [], []>} : vector<8x32xbf16>, vector<32x8xbf16>, vector<8x8xf32> -> vector<8x8xf32>
    %c0_12 = arith.constant 0 : index
    %c0_13 = arith.constant 0 : index
    %c0_14 = arith.constant 0 : index
    %13 = vector.load %arg6[%c0_12, %c0_13, %c0_14] : memref<1x1x8xf32, #tpu.memory_space<vmem>>, vector<1x1x8xf32>
    %14 = vector.shape_cast %13 : vector<1x1x8xf32> to vector<1x8xf32>
    %15 = vector.broadcast %14 : vector<1x8xf32> to vector<8x8xf32>
    %16 = arith.addf %12, %15 : vector<8x8xf32>
    %c0_15 = arith.constant 0 : index
    %c0_16 = arith.constant 0 : index
    %c0_17 = arith.constant 0 : index
    %17 = vector.load %arg7[%c0_15, %c0_16, %c0_17] : memref<1x32x8xbf16, #tpu.memory_space<vmem>>, vector<1x32x8xbf16>
    %18 = vector.shape_cast %17 : vector<1x32x8xbf16> to vector<32x8xbf16>
    %cst_18 = arith.constant dense<0.000000e+00> : vector<8x8xf32>
    %19 = tpu.matmul %2, %18, %cst_18 {dimension_numbers = #tpu.dot_dimension_numbers<[1], [0], [0], [1], [0, 0, 1, 1], [], []>} : vector<8x32xbf16>, vector<32x8xbf16>, vector<8x8xf32> -> vector<8x8xf32>
    %c0_19 = arith.constant 0 : index
    %c0_20 = arith.constant 0 : index
    %c0_21 = arith.constant 0 : index
    %20 = vector.load %arg8[%c0_19, %c0_20, %c0_21] : memref<1x1x8xf32, #tpu.memory_space<vmem>>, vector<1x1x8xf32>
    %21 = vector.shape_cast %20 : vector<1x1x8xf32> to vector<1x8xf32>
    %22 = vector.broadcast %21 : vector<1x8xf32> to vector<8x8xf32>
    %23 = arith.addf %19, %22 : vector<8x8xf32>
    %24 = arith.truncf %9 : vector<8x8xf32> to vector<8x8xbf16>
    %25 = arith.truncf %16 : vector<8x8xf32> to vector<8x8xbf16>
    "tpu.trace_start"() <{level = 10 : i32, message = "tq,sq->ts"}> : () -> ()
    %cst_22 = arith.constant dense<0.000000e+00> : vector<8x8xf32>
    %26 = tpu.matmul %24, %25, %cst_22 {dimension_numbers = #tpu.dot_dimension_numbers<[1], [1], [0], [0], [0, 0, 1, 0], [], []>} : vector<8x8xbf16>, vector<8x8xbf16>, vector<8x8xf32> -> vector<8x8xf32>
    "tpu.trace_stop"() : () -> ()
    %cst_23 = arith.constant 0.353553385 : f32
    %27 = vector.broadcast %cst_23 : f32 to vector<8x8xf32>
    %28 = arith.mulf %26, %27 : vector<8x8xf32>
    %cst_24 = arith.constant dense<0xFF800000> : vector<8xf32>
    %29 = vector.multi_reduction <maximumf>, %28, %cst_24 [1] : vector<8x8xf32> to vector<8xf32>
    %30 = vector.shape_cast %29 : vector<8xf32> to vector<8x1xf32>
    %31 = vector.broadcast %30 : vector<8x1xf32> to vector<8x8xf32>
    %32 = arith.subf %28, %31 : vector<8x8xf32>
    %33 = math.exp %32 : vector<8x8xf32>
    %cst_25 = arith.constant dense<0.000000e+00> : vector<8xf32>
    %34 = vector.multi_reduction <add>, %33, %cst_25 [1] : vector<8x8xf32> to vector<8xf32>
    %35 = vector.shape_cast %34 : vector<8xf32> to vector<8x1xf32>
    %36 = vector.broadcast %35 : vector<8x1xf32> to vector<8x8xf32>
    %37 = arith.divf %33, %36 : vector<8x8xf32>
    %c0_26 = arith.constant 0 : index
    %c0_27 = arith.constant 0 : index
    %c0_28 = arith.constant 0 : index
    %c0_29 = arith.constant 0 : index
    %38 = vector.load %arg20[%c0_26, %c0_27, %c0_28, %c0_29] : memref<1x1x8x8xf32, #tpu.memory_space<vmem>>, vector<1x1x8x8xf32>
    %39 = vector.shape_cast %38 : vector<1x1x8x8xf32> to vector<8x8xf32>
    %40 = vector.shape_cast %37 : vector<8x8xf32> to vector<1x1x8x8xf32>
    tpu.vector_store %arg20[%c0_26, %c0_27, %c0_28, %c0_29], %40 {strides = array<i32>} : memref<1x1x8x8xf32, #tpu.memory_space<vmem>>, vector<1x1x8x8xf32>,
    %41 = arith.truncf %37 : vector<8x8xf32> to vector<8x8xbf16>
    %42 = arith.truncf %23 : vector<8x8xf32> to vector<8x8xbf16>
    %cst_30 = arith.constant dense<0.000000e+00> : vector<8x8xf32>
    %43 = tpu.matmul %41, %42, %cst_30 {dimension_numbers = #tpu.dot_dimension_numbers<[1], [0], [0], [1], [0, 0, 1, 1], [], []>} : vector<8x8xbf16>, vector<8x8xbf16>, vector<8x8xf32> -> vector<8x8xf32>
    %44 = arith.truncf %43 : vector<8x8xf32> to vector<8x8xbf16>
    %c0_31 = arith.constant 0 : index
    %c0_32 = arith.constant 0 : index
    %c0_33 = arith.constant 0 : index
    %45 = vector.load %arg9[%c0_31, %c0_32, %c0_33] : memref<1x8x32xbf16, #tpu.memory_space<vmem>>, vector<1x8x32xbf16>
    %46 = vector.shape_cast %45 : vector<1x8x32xbf16> to vector<8x32xbf16>
    %cst_34 = arith.constant dense<0.000000e+00> : vector<8x32xf32>
    %47 = tpu.matmul %44, %46, %cst_34 {dimension_numbers = #tpu.dot_dimension_numbers<[1], [0], [0], [1], [0, 0, 1, 1], [], []>} : vector<8x8xbf16>, vector<8x32xbf16>, vector<8x32xf32> -> vector<8x32xf32>
    %c0_i32 = arith.constant 0 : i32
    %48 = arith.cmpi eq, %arg1, %c0_i32 : i32
    %49 = arith.extui %48 : i1 to i32
    %c0_i32_35 = arith.constant 0 : i32
    %50 = arith.cmpi ne, %49, %c0_i32_35 : i32
    scf.if %50 {
      %cst_41 = arith.constant 0.000000e+00 : f32
      %57 = vector.broadcast %cst_41 : f32 to vector<8x32xf32>
      %c0_42 = arith.constant 0 : index
      %c0_43 = arith.constant 0 : index
      %58 = vector.load %arg21[%c0_42, %c0_43] : memref<8x32xf32, #tpu.memory_space<vmem>>, vector<8x32xf32>
      tpu.vector_store %arg21[%c0_42, %c0_43], %57 {strides = array<i32>} : memref<8x32xf32, #tpu.memory_space<vmem>>, vector<8x32xf32>,
    } else {
    }
    %c0_36 = arith.constant 0 : index
    %c0_37 = arith.constant 0 : index
    %51 = vector.load %arg21[%c0_36, %c0_37] : memref<8x32xf32, #tpu.memory_space<vmem>>, vector<8x32xf32>
    %52 = arith.addf %51, %47 : vector<8x32xf32>
    %c0_38 = arith.constant 0 : index
    %c0_39 = arith.constant 0 : index
    %53 = vector.load %arg21[%c0_38, %c0_39] : memref<8x32xf32, #tpu.memory_space<vmem>>, vector<8x32xf32>
    tpu.vector_store %arg21[%c0_38, %c0_39], %52 {strides = array<i32>} : memref<8x32xf32, #tpu.memory_space<vmem>>, vector<8x32xf32>,
    %c3_i32 = arith.constant 3 : i32
    %54 = arith.cmpi eq, %arg1, %c3_i32 : i32
    %55 = arith.extui %54 : i1 to i32
    %c0_i32_40 = arith.constant 0 : i32
    %56 = arith.cmpi ne, %55, %c0_i32_40 : i32
    scf.if %56 {
      %c0_41 = arith.constant 0 : index
      %c0_42 = arith.constant 0 : index
      %57 = vector.load %arg21[%c0_41, %c0_42] : memref<8x32xf32, #tpu.memory_space<vmem>>, vector<8x32xf32>
      %c0_43 = arith.constant 0 : index
      %c0_44 = arith.constant 0 : index
      %58 = vector.load %arg10[%c0_43, %c0_44] : memref<1x32xf32, #tpu.memory_space<vmem>>, vector<1x32xf32>
      %59 = vector.broadcast %58 : vector<1x32xf32> to vector<8x32xf32>
      %60 = arith.addf %57, %59 : vector<8x32xf32>
      %61 = arith.addf %60, %1 : vector<8x32xf32>
      %c0_45 = arith.constant 0 : index
      %c0_46 = arith.constant 0 : index
      %62 = vector.load %arg11[%c0_45, %c0_46] : memref<1x32xf32, #tpu.memory_space<vmem>>, vector<1x32xf32>
      %c0_47 = arith.constant 0 : index
      %c0_48 = arith.constant 0 : index
      %63 = vector.load %arg12[%c0_47, %c0_48] : memref<1x32xf32, #tpu.memory_space<vmem>>, vector<1x32xf32>
      %cst_49 = arith.constant dense<0.000000e+00> : vector<8xf32>
      %64 = vector.multi_reduction <add>, %61, %cst_49 [1] : vector<8x32xf32> to vector<8xf32>
      %65 = vector.shape_cast %64 : vector<8xf32> to vector<8x1xf32>
      %cst_50 = arith.constant 3.200000e+01 : f32
      %66 = vector.broadcast %cst_50 : f32 to vector<8x1xf32>
      %67 = arith.divf %65, %66 : vector<8x1xf32>
      %68 = vector.broadcast %67 : vector<8x1xf32> to vector<8x32xf32>
      %69 = arith.subf %61, %68 : vector<8x32xf32>
      %70 = arith.mulf %69, %69 : vector<8x32xf32>
      %cst_51 = arith.constant dense<0.000000e+00> : vector<8xf32>
      %71 = vector.multi_reduction <add>, %70, %cst_51 [1] : vector<8x32xf32> to vector<8xf32>
      %72 = vector.shape_cast %71 : vector<8xf32> to vector<8x1xf32>
      %cst_52 = arith.constant 3.200000e+01 : f32
      %73 = vector.broadcast %cst_52 : f32 to vector<8x1xf32>
      %74 = arith.divf %72, %73 : vector<8x1xf32>
      %cst_53 = arith.constant 9.99999974E-6 : f32
      %75 = vector.broadcast %cst_53 : f32 to vector<8x1xf32>
      %76 = arith.addf %74, %75 : vector<8x1xf32>
      %77 = math.rsqrt %76 : vector<8x1xf32>
      %78 = vector.broadcast %67 : vector<8x1xf32> to vector<8x32xf32>
      %79 = arith.subf %61, %78 : vector<8x32xf32>
      %80 = vector.broadcast %77 : vector<8x1xf32> to vector<8x32xf32>
      %81 = arith.mulf %79, %80 : vector<8x32xf32>
      %82 = vector.broadcast %62 : vector<1x32xf32> to vector<8x32xf32>
      %83 = arith.mulf %81, %82 : vector<8x32xf32>
      %84 = vector.broadcast %63 : vector<1x32xf32> to vector<8x32xf32>
      %85 = arith.addf %83, %84 : vector<8x32xf32>
      %86 = arith.truncf %85 : vector<8x32xf32> to vector<8x32xbf16>
      %c0_54 = arith.constant 0 : index
      %c0_55 = arith.constant 0 : index
      %87 = vector.load %arg13[%c0_54, %c0_55] : memref<32x64xbf16, #tpu.memory_space<vmem>>, vector<32x64xbf16>
      %cst_56 = arith.constant dense<0.000000e+00> : vector<8x64xf32>
      %88 = tpu.matmul %86, %87, %cst_56 {dimension_numbers = #tpu.dot_dimension_numbers<[1], [0], [0], [1], [0, 0, 1, 1], [], []>} : vector<8x32xbf16>, vector<32x64xbf16>, vector<8x64xf32> -> vector<8x64xf32>
      %c0_57 = arith.constant 0 : index
      %c0_58 = arith.constant 0 : index
      %89 = vector.load %arg14[%c0_57, %c0_58] : memref<1x64xf32, #tpu.memory_space<vmem>>, vector<1x64xf32>
      %90 = vector.broadcast %89 : vector<1x64xf32> to vector<8x64xf32>
      %91 = arith.addf %88, %90 : vector<8x64xf32>
      %cst_59 = arith.constant 0.000000e+00 : f32
      %92 = vector.broadcast %cst_59 : f32 to vector<8x64xf32>
      %93 = arith.maximumf %91, %92 : vector<8x64xf32>
      %94 = arith.truncf %93 : vector<8x64xf32> to vector<8x64xbf16>
      %c0_60 = arith.constant 0 : index
      %c0_61 = arith.constant 0 : index
      %95 = vector.load %arg15[%c0_60, %c0_61] : memref<64x32xbf16, #tpu.memory_space<vmem>>, vector<64x32xbf16>
      %cst_62 = arith.constant dense<0.000000e+00> : vector<8x32xf32>
      %96 = tpu.matmul %94, %95, %cst_62 {dimension_numbers = #tpu.dot_dimension_numbers<[1], [0], [0], [1], [0, 0, 1, 1], [], []>} : vector<8x64xbf16>, vector<64x32xbf16>, vector<8x32xf32> -> vector<8x32xf32>
      %c0_63 = arith.constant 0 : index
      %c0_64 = arith.constant 0 : index
      %97 = vector.load %arg16[%c0_63, %c0_64] : memref<1x32xf32, #tpu.memory_space<vmem>>, vector<1x32xf32>
      %98 = vector.broadcast %97 : vector<1x32xf32> to vector<8x32xf32>
      %99 = arith.addf %96, %98 : vector<8x32xf32>
      %100 = arith.addf %99, %85 : vector<8x32xf32>
      %c0_65 = arith.constant 0 : index
      %c0_66 = arith.constant 0 : index
      %101 = vector.load %arg17[%c0_65, %c0_66] : memref<1x32xf32, #tpu.memory_space<vmem>>, vector<1x32xf32>
      %c0_67 = arith.constant 0 : index
      %c0_68 = arith.constant 0 : index
      %102 = vector.load %arg18[%c0_67, %c0_68] : memref<1x32xf32, #tpu.memory_space<vmem>>, vector<1x32xf32>
      %cst_69 = arith.constant dense<0.000000e+00> : vector<8xf32>
      %103 = vector.multi_reduction <add>, %100, %cst_69 [1] : vector<8x32xf32> to vector<8xf32>
      %104 = vector.shape_cast %103 : vector<8xf32> to vector<8x1xf32>
      %cst_70 = arith.constant 3.200000e+01 : f32
      %105 = vector.broadcast %cst_70 : f32 to vector<8x1xf32>
      %106 = arith.divf %104, %105 : vector<8x1xf32>
      %107 = vector.broadcast %106 : vector<8x1xf32> to vector<8x32xf32>
      %108 = arith.subf %100, %107 : vector<8x32xf32>
      %109 = arith.mulf %108, %108 : vector<8x32xf32>
      %cst_71 = arith.constant dense<0.000000e+00> : vector<8xf32>
      %110 = vector.multi_reduction <add>, %109, %cst_71 [1] : vector<8x32xf32> to vector<8xf32>
      %111 = vector.shape_cast %110 : vector<8xf32> to vector<8x1xf32>
      %cst_72 = arith.constant 3.200000e+01 : f32
      %112 = vector.broadcast %cst_72 : f32 to vector<8x1xf32>
      %113 = arith.divf %111, %112 : vector<8x1xf32>
      %cst_73 = arith.constant 9.99999974E-6 : f32
      %114 = vector.broadcast %cst_73 : f32 to vector<8x1xf32>
      %115 = arith.addf %113, %114 : vector<8x1xf32>
      %116 = math.rsqrt %115 : vector<8x1xf32>
      %117 = vector.broadcast %106 : vector<8x1xf32> to vector<8x32xf32>
      %118 = arith.subf %100, %117 : vector<8x32xf32>
      %119 = vector.broadcast %116 : vector<8x1xf32> to vector<8x32xf32>
      %120 = arith.mulf %118, %119 : vector<8x32xf32>
      %121 = vector.broadcast %101 : vector<1x32xf32> to vector<8x32xf32>
      %122 = arith.mulf %120, %121 : vector<8x32xf32>
      %123 = vector.broadcast %102 : vector<1x32xf32> to vector<8x32xf32>
      %124 = arith.addf %122, %123 : vector<8x32xf32>
      %c0_74 = arith.constant 0 : index
      %c0_75 = arith.constant 0 : index
      %c0_76 = arith.constant 0 : index
      %125 = vector.load %arg19[%c0_74, %c0_75, %c0_76] : memref<1x8x32xf32, #tpu.memory_space<vmem>>, vector<1x8x32xf32>
      %126 = vector.shape_cast %125 : vector<1x8x32xf32> to vector<8x32xf32>
      %127 = vector.shape_cast %124 : vector<8x32xf32> to vector<1x8x32xf32>
      tpu.vector_store %arg19[%c0_74, %c0_75, %c0_76], %127 {strides = array<i32>} : memref<1x8x32xf32, #tpu.memory_space<vmem>>, vector<1x8x32xf32>,
    } else {
    }
    return
  }
  func.func @transform_0(%arg0: i32, %arg1: i32) -> (i32, i32, i32) {
    %c0_i32 = arith.constant 0 : i32
    %c0_i32_0 = arith.constant 0 : i32
    %c0_i32_1 = arith.constant 0 : i32
    return %arg0, %c0_i32, %c0_i32_0 : i32, i32, i32
  }
  func.func @transform_1(%arg0: i32, %arg1: i32) -> (i32, i32, i32) {
    %c0_i32 = arith.constant 0 : i32
    %c0_i32_0 = arith.constant 0 : i32
    %c0_i32_1 = arith.constant 0 : i32
    return %arg1, %c0_i32, %c0_i32_0 : i32, i32, i32
  }
  func.func @transform_2(%arg0: i32, %arg1: i32) -> (i32, i32, i32) {
    %c0_i32 = arith.constant 0 : i32
    %c0_i32_0 = arith.constant 0 : i32
    %c0_i32_1 = arith.constant 0 : i32
    return %arg1, %c0_i32, %c0_i32_0 : i32, i32, i32
  }
  func.func @transform_3(%arg0: i32, %arg1: i32) -> (i32, i32, i32) {
    %c0_i32 = arith.constant 0 : i32
    %c0_i32_0 = arith.constant 0 : i32
    %c0_i32_1 = arith.constant 0 : i32
    return %arg1, %c0_i32, %c0_i32_0 : i32, i32, i32
  }
  func.func @transform_4(%arg0: i32, %arg1: i32) -> (i32, i32, i32) {
    %c0_i32 = arith.constant 0 : i32
    %c0_i32_0 = arith.constant 0 : i32
    %c0_i32_1 = arith.constant 0 : i32
    return %arg1, %c0_i32, %c0_i32_0 : i32, i32, i32
  }
  func.func @transform_5(%arg0: i32, %arg1: i32) -> (i32, i32, i32) {
    %c0_i32 = arith.constant 0 : i32
    %c0_i32_0 = arith.constant 0 : i32
    %c0_i32_1 = arith.constant 0 : i32
    return %arg1, %c0_i32, %c0_i32_0 : i32, i32, i32
  }
  func.func @transform_6(%arg0: i32, %arg1: i32) -> (i32, i32, i32) {
    %c0_i32 = arith.constant 0 : i32
    %c0_i32_0 = arith.constant 0 : i32
    %c0_i32_1 = arith.constant 0 : i32
    return %arg1, %c0_i32, %c0_i32_0 : i32, i32, i32
  }
  func.func @transform_7(%arg0: i32, %arg1: i32) -> (i32, i32, i32) {
    %c0_i32 = arith.constant 0 : i32
    %c0_i32_0 = arith.constant 0 : i32
    %c0_i32_1 = arith.constant 0 : i32
    return %arg1, %c0_i32, %c0_i32_0 : i32, i32, i32
  }
  func.func @transform_8(%arg0: i32, %arg1: i32) -> (i32, i32) {
    %c0_i32 = arith.constant 0 : i32
    %c0_i32_0 = arith.constant 0 : i32
    %c0_i32_1 = arith.constant 0 : i32
    return %c0_i32, %c0_i32_0 : i32, i32
  }
  func.func @transform_9(%arg0: i32, %arg1: i32) -> (i32, i32) {
    %c0_i32 = arith.constant 0 : i32
    %c0_i32_0 = arith.constant 0 : i32
    %c0_i32_1 = arith.constant 0 : i32
    return %c0_i32, %c0_i32_0 : i32, i32
  }
  func.func @transform_10(%arg0: i32, %arg1: i32) -> (i32, i32) {
    %c0_i32 = arith.constant 0 : i32
    %c0_i32_0 = arith.constant 0 : i32
    %c0_i32_1 = arith.constant 0 : i32
    return %c0_i32, %c0_i32_0 : i32, i32
  }
  func.func @transform_11(%arg0: i32, %arg1: i32) -> (i32, i32) {
    %c0_i32 = arith.constant 0 : i32
    %c0_i32_0 = arith.constant 0 : i32
    %c0_i32_1 = arith.constant 0 : i32
    return %c0_i32, %c0_i32_0 : i32, i32
  }
  func.func @transform_12(%arg0: i32, %arg1: i32) -> (i32, i32) {
    %c0_i32 = arith.constant 0 : i32
    %c0_i32_0 = arith.constant 0 : i32
    %c0_i32_1 = arith.constant 0 : i32
    return %c0_i32, %c0_i32_0 : i32, i32
  }
  func.func @transform_13(%arg0: i32, %arg1: i32) -> (i32, i32) {
    %c0_i32 = arith.constant 0 : i32
    %c0_i32_0 = arith.constant 0 : i32
    %c0_i32_1 = arith.constant 0 : i32
    return %c0_i32, %c0_i32_0 : i32, i32
  }
  func.func @transform_14(%arg0: i32, %arg1: i32) -> (i32, i32) {
    %c0_i32 = arith.constant 0 : i32
    %c0_i32_0 = arith.constant 0 : i32
    %c0_i32_1 = arith.constant 0 : i32
    return %c0_i32, %c0_i32_0 : i32, i32
  }
  func.func @transform_15(%arg0: i32, %arg1: i32) -> (i32, i32) {
    %c0_i32 = arith.constant 0 : i32
    %c0_i32_0 = arith.constant 0 : i32
    %c0_i32_1 = arith.constant 0 : i32
    return %c0_i32, %c0_i32_0 : i32, i32
  }
  func.func @transform_16(%arg0: i32, %arg1: i32) -> (i32, i32) {
    %c0_i32 = arith.constant 0 : i32
    %c0_i32_0 = arith.constant 0 : i32
    %c0_i32_1 = arith.constant 0 : i32
    return %c0_i32, %c0_i32_0 : i32, i32
  }
  func.func @transform_17(%arg0: i32, %arg1: i32) -> (i32, i32, i32) {
    %c0_i32 = arith.constant 0 : i32
    %c0_i32_0 = arith.constant 0 : i32
    %c0_i32_1 = arith.constant 0 : i32
    return %arg0, %c0_i32, %c0_i32_0 : i32, i32, i32
  }
  func.func @transform_18(%arg0: i32, %arg1: i32) -> (i32, i32, i32, i32) {
    %c0_i32 = arith.constant 0 : i32
    %c0_i32_0 = arith.constant 0 : i32
    %c0_i32_1 = arith.constant 0 : i32
    return %arg1, %arg0, %c0_i32, %c0_i32_0 : i32, i32, i32, i32
  }
}

</mosaic_0001>

<llo_original>
// kernel: tpu_custom_call.1
$region0: #{tpu_custom_call.1}
  #allocation0 [shape = 'u32[]', space=smem, size = 0x4, offset = 0x4, fixed_abs, tag = 'smem constant byte address 0x4 - core index']
  #allocation1 [shape = 'u32[144,128]{1,0:T(1,128)}', space=vmem, size = 0x12000, scoped, tag = 'internal scratch']
  #allocation2 [shape = 'f32[8,32]{1,0:T(8,128)}', space=vmem, size = 0x1000, scoped, tag = 'scratch operand']
  %s0 = inlined_call_operand.vmem [shape: f32[2,8,32], index: 0, kind: input, shape index: {}]
  %s1 = inlined_call_operand.vmem [shape: bf16[4,32,8], index: 1, kind: input, shape index: {}]
  %s2 = inlined_call_operand.vmem [shape: f32[4,1,8], index: 2, kind: input, shape index: {}]
  %s3 = inlined_call_operand.vmem [shape: bf16[4,32,8], index: 3, kind: input, shape index: {}]
  %s4 = inlined_call_operand.vmem [shape: f32[4,1,8], index: 4, kind: input, shape index: {}]
  %s5 = inlined_call_operand.vmem [shape: bf16[4,32,8], index: 5, kind: input, shape index: {}]
  %s6 = inlined_call_operand.vmem [shape: f32[4,1,8], index: 6, kind: input, shape index: {}]
  %s7 = inlined_call_operand.vmem [shape: bf16[4,8,32], index: 7, kind: input, shape index: {}]
  %s8 = inlined_call_operand.vmem [shape: f32[1,32], index: 8, kind: input, shape index: {}]
  %s9 = inlined_call_operand.vmem [shape: f32[1,32], index: 9, kind: input, shape index: {}]
  %s10 = inlined_call_operand.vmem [shape: f32[1,32], index: 10, kind: input, shape index: {}]
  %s11 = inlined_call_operand.vmem [shape: bf16[32,64], index: 11, kind: input, shape index: {}]
  %s12 = inlined_call_operand.vmem [shape: f32[1,64], index: 12, kind: input, shape index: {}]
  %s13 = inlined_call_operand.vmem [shape: bf16[64,32], index: 13, kind: input, shape index: {}]
  %s14 = inlined_call_operand.vmem [shape: f32[1,32], index: 14, kind: input, shape index: {}]
  %s15 = inlined_call_operand.vmem [shape: f32[1,32], index: 15, kind: input, shape index: {}]
  %s16 = inlined_call_operand.vmem [shape: f32[1,32], index: 16, kind: input, shape index: {}]
  %s17 = inlined_call_operand.hbm [shape: f32[2,8,32], index: 17, kind: output, shape index: {0}]
  %s18 = inlined_call_operand.hbm [shape: f32[4,2,8,8], index: 18, kind: output, shape index: {1}]
  %19 = xla_tuple %s17, %s18
  %s20 = sld [smem:[#allocation0]]
  $region117: #{tpu_custom_call.1} parent=0
    _
  %s22 = ssub.s32 1, %s20
  %s23 = scalar_select 0, %s22, %s20
  $region1: #{tpu_custom_call.1} parent=0
    #allocation3 [shape = 'u8[8192]{0}', space=vmem, size = 0x2000, scoped, tag = 'output window, operand 0']
    #allocation4 [shape = 's32[2]{0}', space=sflag, size = 0x8, scoped, tag = 'scoped memory for tpu_custom_call.1']
    #allocation5 [shape = 'u8[8192]{0}', space=vmem, size = 0x2000, scoped, tag = 'output window, operand 1']
    #allocation6 [shape = 's32[2]{0}', space=sflag, size = 0x8, scoped, tag = 'scoped memory for tpu_custom_call.1']
    %24 = vsyncpa [#allocation4], 0
    %s25 = scalar_lea.sflag [#allocation4], 1
    %26 = vsyncpa %s25, 0
    %27 = vsyncpa [#allocation6], 0
    %s28 = scalar_lea.sflag [#allocation6], 1
    %29 = vsyncpa %s28, 0
    loop: start=0, step=1, limit=10
    $region2: #{tpu_custom_call.1} parent=1 // loop_pre_header
      _
    $region3: #{tpu_custom_call.1} parent=1 // loop_header
      %s31 = sphi 0, %s35
      %p32 = scmp.ge.s32.totalorder %s31, 10
      %s38 = sphi 0, %s50
      %s39 = sphi 0, %s46
      %s40 = sphi 0, %s38
      %s41 = sphi 0, %s39
      %s42 = sphi 0, %s40
      %s43 = sphi 0, %s41
      %s53 = sphi 0, %s55
      %s56 = sphi 0, %s53
      %s57 = sphi 0, %s56
      %s73 = sphi 0, %s57
      %s79 = sphi 0, %s81
      %s82 = sphi 0, %s79
      %s83 = sphi 0, %s82
      %s99 = sphi 0, %s83
      %s105 = sphi 0, %s107
      %s108 = sphi 0, %s105
      %s109 = sphi 0, %s108
      %s125 = sphi 0, %s109
      %s131 = sphi 0, %s133
      %s134 = sphi 0, %s131
      %s135 = sphi 0, %s134
      %s151 = sphi 0, %s135
      %s157 = sphi 0, %s159
      %s160 = sphi 0, %s157
      %s161 = sphi 0, %s160
      %s177 = sphi 0, %s161
      %s183 = sphi 0, %s185
      %s186 = sphi 0, %s183
      %s187 = sphi 0, %s186
      %s203 = sphi 0, %s187
      %s209 = sphi 0, %s211
      %s212 = sphi 0, %s209
      %s213 = sphi 0, %s212
      %s229 = sphi 0, %s213
      %s235 = sphi 0, %s237
      %s238 = sphi 0, %s235
      %s239 = sphi 0, %s238
      %s255 = sphi 0, %s239
      %s259 = sphi 0, %s259
      %s261 = sphi 0, %s259
      %s262 = sphi 0, %s261
      %s276 = sphi 0, %s262
      %s280 = sphi 0, %s280
      %s282 = sphi 0, %s280
      %s283 = sphi 0, %s282
      %s297 = sphi 0, %s283
      %s301 = sphi 0, %s301
      %s303 = sphi 0, %s301
      %s304 = sphi 0, %s303
      %s318 = sphi 0, %s304
      %s322 = sphi 0, %s322
      %s324 = sphi 0, %s322
      %s325 = sphi 0, %s324
      %s339 = sphi 0, %s325
      %s343 = sphi 0, %s343
      %s345 = sphi 0, %s343
      %s346 = sphi 0, %s345
      %s360 = sphi 0, %s346
      %s364 = sphi 0, %s364
      %s366 = sphi 0, %s364
      %s367 = sphi 0, %s366
      %s381 = sphi 0, %s367
      %s385 = sphi 0, %s385
      %s387 = sphi 0, %s385
      %s388 = sphi 0, %s387
      %s402 = sphi 0, %s388
      %s406 = sphi 0, %s406
      %s408 = sphi 0, %s406
      %s409 = sphi 0, %s408
      %s423 = sphi 0, %s409
      %s427 = sphi 0, %s427
      %s429 = sphi 0, %s427
      %s430 = sphi 0, %s429
      %s444 = sphi 0, %s430
      %s450 = sphi 0, %s452
      %s453 = sphi 0, %s450
      %s454 = sphi 0, %s453
      %s470 = sphi 0, %s454
      %s478 = sphi 0, %s480
      %s481 = sphi 0, %s478
      %s482 = sphi 0, %s481
      %s498 = sphi 0, %s482
    $region4: #{tpu_custom_call.1} parent=1 // loop_header_branch
      %34 = sbr.rel (%p32) target = $region8
    $region5: #{tpu_custom_call.1} parent=1 // loop_body
      %s36 = ssub.s32 %s31, 1
      %s37 = ssub.s32 %s31, 2
      %s44 = sadd.s32 1, %s39
      %p45 = scmp.ge.s32.totalorder %s44, 4
      %s46 = scalar_select %p45, 0, %s44
      %s47 = sadd.s32 1, %s38
      %s48 = scalar_select %p45, %s47, %s38
      %p49 = scmp.ge.s32.totalorder %s48, 2
      %s50 = scalar_select %p49, 0, %s48
      %s51 = ssub.s32 %s38, %s50
      %p52 = scmp.eq.s32.totalorder %s51, 0
      %s54 = sadd.s32 %s53, 1
      %s55 = scalar_select %p52, %s53, %s54
      %p58 = pneg %p52
      %p59 = scmp.eq.s32.totalorder %s31, 7
      %p60 = por %p58, %p59
      %p61 = scmp.ne.s32.totalorder %s53, %s56
      %p62 = scmp.eq.s32.totalorder %s31, 0
      %p63 = por %p61, %p62
      %p64 = scmp.ne.s32.totalorder %s53, %s56
      %p65 = scmp.eq.s32.totalorder %s36, 7
      %p66 = por %p64, %p65
      %p67 = scmp.ne.s32.totalorder %s56, %s57
      %p68 = scmp.eq.s32.totalorder %s36, 0
      %p69 = por %p67, %p68
      %p70 = scmp.ne.s32.totalorder %s56, %s57
      %p71 = scmp.eq.s32.totalorder %s37, 7
      %p72 = por %p70, %p71
      %p74 = scmp.ne.s32.totalorder %s57, %s73
      %p75 = scmp.eq.s32.totalorder %s37, 0
      %p76 = por %p74, %p75
      %s77 = ssub.s32 %s39, %s46
      %p78 = scmp.eq.s32.totalorder %s77, 0
      %s80 = sadd.s32 %s79, 1
      %s81 = scalar_select %p78, %s79, %s80
      %p84 = pneg %p78
      %p85 = scmp.eq.s32.totalorder %s31, 7
      %p86 = por %p84, %p85
      %p87 = scmp.ne.s32.totalorder %s79, %s82
      %p88 = scmp.eq.s32.totalorder %s31, 0
      %p89 = por %p87, %p88
      %p90 = scmp.ne.s32.totalorder %s79, %s82
      %p91 = scmp.eq.s32.totalorder %s36, 7
      %p92 = por %p90, %p91
      %p93 = scmp.ne.s32.totalorder %s82, %s83
      %p94 = scmp.eq.s32.totalorder %s36, 0
      %p95 = por %p93, %p94
      %p96 = scmp.ne.s32.totalorder %s82, %s83
      %p97 = scmp.eq.s32.totalorder %s37, 7
      %p98 = por %p96, %p97
      %p100 = scmp.ne.s32.totalorder %s83, %s99
      %p101 = scmp.eq.s32.totalorder %s37, 0
      %p102 = por %p100, %p101
      %s103 = ssub.s32 %s39, %s46
      %p104 = scmp.eq.s32.totalorder %s103, 0
      %s106 = sadd.s32 %s105, 1
      %s107 = scalar_select %p104, %s105, %s106
      %p110 = pneg %p104
      %p111 = scmp.eq.s32.totalorder %s31, 7
      %p112 = por %p110, %p111
      %p113 = scmp.ne.s32.totalorder %s105, %s108
      %p114 = scmp.eq.s32.totalorder %s31, 0
      %p115 = por %p113, %p114
      %p116 = scmp.ne.s32.totalorder %s105, %s108
      %p117 = scmp.eq.s32.totalorder %s36, 7
      %p118 = por %p116, %p117
      %p119 = scmp.ne.s32.totalorder %s108, %s109
      %p120 = scmp.eq.s32.totalorder %s36, 0
      %p121 = por %p119, %p120
      %p122 = scmp.ne.s32.totalorder %s108, %s109
      %p123 = scmp.eq.s32.totalorder %s37, 7
      %p124 = por %p122, %p123
      %p126 = scmp.ne.s32.totalorder %s109, %s125
      %p127 = scmp.eq.s32.totalorder %s37, 0
      %p128 = por %p126, %p127
      %s129 = ssub.s32 %s39, %s46
      %p130 = scmp.eq.s32.totalorder %s129, 0
      %s132 = sadd.s32 %s131, 1
      %s133 = scalar_select %p130, %s131, %s132
      %p136 = pneg %p130
      %p137 = scmp.eq.s32.totalorder %s31, 7
      %p138 = por %p136, %p137
      %p139 = scmp.ne.s32.totalorder %s131, %s134
      %p140 = scmp.eq.s32.totalorder %s31, 0
      %p141 = por %p139, %p140
      %p142 = scmp.ne.s32.totalorder %s131, %s134
      %p143 = scmp.eq.s32.totalorder %s36, 7
      %p144 = por %p142, %p143
      %p145 = scmp.ne.s32.totalorder %s134, %s135
      %p146 = scmp.eq.s32.totalorder %s36, 0
      %p147 = por %p145, %p146
      %p148 = scmp.ne.s32.totalorder %s134, %s135
      %p149 = scmp.eq.s32.totalorder %s37, 7
      %p150 = por %p148, %p149
      %p152 = scmp.ne.s32.totalorder %s135, %s151
      %p153 = scmp.eq.s32.totalorder %s37, 0
      %p154 = por %p152, %p153
      %s155 = ssub.s32 %s39, %s46
      %p156 = scmp.eq.s32.totalorder %s155, 0
      %s158 = sadd.s32 %s157, 1
      %s159 = scalar_select %p156, %s157, %s158
      %p162 = pneg %p156
      %p163 = scmp.eq.s32.totalorder %s31, 7
      %p164 = por %p162, %p163
      %p165 = scmp.ne.s32.totalorder %s157, %s160
      %p166 = scmp.eq.s32.totalorder %s31, 0
      %p167 = por %p165, %p166
      %p168 = scmp.ne.s32.totalorder %s157, %s160
      %p169 = scmp.eq.s32.totalorder %s36, 7
      %p170 = por %p168, %p169
      %p171 = scmp.ne.s32.totalorder %s160, %s161
      %p172 = scmp.eq.s32.totalorder %s36, 0
      %p173 = por %p171, %p172
      %p174 = scmp.ne.s32.totalorder %s160, %s161
      %p175 = scmp.eq.s32.totalorder %s37, 7
      %p176 = por %p174, %p175
      %p178 = scmp.ne.s32.totalorder %s161, %s177
      %p179 = scmp.eq.s32.totalorder %s37, 0
      %p180 = por %p178, %p179
      %s181 = ssub.s32 %s39, %s46
      %p182 = scmp.eq.s32.totalorder %s181, 0
      %s184 = sadd.s32 %s183, 1
      %s185 = scalar_select %p182, %s183, %s184
      %p188 = pneg %p182
      %p189 = scmp.eq.s32.totalorder %s31, 7
      %p190 = por %p188, %p189
      %p191 = scmp.ne.s32.totalorder %s183, %s186
      %p192 = scmp.eq.s32.totalorder %s31, 0
      %p193 = por %p191, %p192
      %p194 = scmp.ne.s32.totalorder %s183, %s186
      %p195 = scmp.eq.s32.totalorder %s36, 7
      %p196 = por %p194, %p195
      %p197 = scmp.ne.s32.totalorder %s186, %s187
      %p198 = scmp.eq.s32.totalorder %s36, 0
      %p199 = por %p197, %p198
      %p200 = scmp.ne.s32.totalorder %s186, %s187
      %p201 = scmp.eq.s32.totalorder %s37, 7
      %p202 = por %p200, %p201
      %p204 = scmp.ne.s32.totalorder %s187, %s203
      %p205 = scmp.eq.s32.totalorder %s37, 0
      %p206 = por %p204, %p205
      %s207 = ssub.s32 %s39, %s46
      %p208 = scmp.eq.s32.totalorder %s207, 0
      %s210 = sadd.s32 %s209, 1
      %s211 = scalar_select %p208, %s209, %s210
      %p214 = pneg %p208
      %p215 = scmp.eq.s32.totalorder %s31, 7
      %p216 = por %p214, %p215
      %p217 = scmp.ne.s32.totalorder %s209, %s212
      %p218 = scmp.eq.s32.totalorder %s31, 0
      %p219 = por %p217, %p218
      %p220 = scmp.ne.s32.totalorder %s209, %s212
      %p221 = scmp.eq.s32.totalorder %s36, 7
      %p222 = por %p220, %p221
      %p223 = scmp.ne.s32.totalorder %s212, %s213
      %p224 = scmp.eq.s32.totalorder %s36, 0
      %p225 = por %p223, %p224
      %p226 = scmp.ne.s32.totalorder %s212, %s213
      %p227 = scmp.eq.s32.totalorder %s37, 7
      %p228 = por %p226, %p227
      %p230 = scmp.ne.s32.totalorder %s213, %s229
      %p231 = scmp.eq.s32.totalorder %s37, 0
      %p232 = por %p230, %p231
      %s233 = ssub.s32 %s39, %s46
      %p234 = scmp.eq.s32.totalorder %s233, 0
      %s236 = sadd.s32 %s235, 1
      %s237 = scalar_select %p234, %s235, %s236
      %p240 = pneg %p234
      %p241 = scmp.eq.s32.totalorder %s31, 7
      %p242 = por %p240, %p241
      %p243 = scmp.ne.s32.totalorder %s235, %s238
      %p244 = scmp.eq.s32.totalorder %s31, 0
      %p245 = por %p243, %p244
      %p246 = scmp.ne.s32.totalorder %s235, %s238
      %p247 = scmp.eq.s32.totalorder %s36, 7
      %p248 = por %p246, %p247
      %p249 = scmp.ne.s32.totalorder %s238, %s239
      %p250 = scmp.eq.s32.totalorder %s36, 0
      %p251 = por %p249, %p250
      %p252 = scmp.ne.s32.totalorder %s238, %s239
      %p253 = scmp.eq.s32.totalorder %s37, 7
      %p254 = por %p252, %p253
      %p256 = scmp.ne.s32.totalorder %s239, %s255
      %p257 = scmp.eq.s32.totalorder %s37, 0
      %p258 = por %p256, %p257
      %s260 = sadd.s32 %s259, 1
      %p263 = scmp.eq.s32.totalorder %s31, 7
      %p264 = scmp.ne.s32.totalorder %s259, %s261
      %p265 = scmp.eq.s32.totalorder %s31, 0
      %p266 = por %p264, %p265
      %p267 = scmp.ne.s32.totalorder %s259, %s261
      %p268 = scmp.eq.s32.totalorder %s36, 7
      %p269 = por %p267, %p268
      %p270 = scmp.ne.s32.totalorder %s261, %s262
      %p271 = scmp.eq.s32.totalorder %s36, 0
      %p272 = por %p270, %p271
      %p273 = scmp.ne.s32.totalorder %s261, %s262
      %p274 = scmp.eq.s32.totalorder %s37, 7
      %p275 = por %p273, %p274
      %p277 = scmp.ne.s32.totalorder %s262, %s276
      %p278 = scmp.eq.s32.totalorder %s37, 0
      %p279 = por %p277, %p278
      %s281 = sadd.s32 %s280, 1
      %p284 = scmp.eq.s32.totalorder %s31, 7
      %p285 = scmp.ne.s32.totalorder %s280, %s282
      %p286 = scmp.eq.s32.totalorder %s31, 0
      %p287 = por %p285, %p286
      %p288 = scmp.ne.s32.totalorder %s280, %s282
      %p289 = scmp.eq.s32.totalorder %s36, 7
      %p290 = por %p288, %p289
      %p291 = scmp.ne.s32.totalorder %s282, %s283
      %p292 = scmp.eq.s32.totalorder %s36, 0
      %p293 = por %p291, %p292
      %p294 = scmp.ne.s32.totalorder %s282, %s283
      %p295 = scmp.eq.s32.totalorder %s37, 7
      %p296 = por %p294, %p295
      %p298 = scmp.ne.s32.totalorder %s283, %s297
      %p299 = scmp.eq.s32.totalorder %s37, 0
      %p300 = por %p298, %p299
      %s302 = sadd.s32 %s301, 1
      %p305 = scmp.eq.s32.totalorder %s31, 7
      %p306 = scmp.ne.s32.totalorder %s301, %s303
      %p307 = scmp.eq.s32.totalorder %s31, 0
      %p308 = por %p306, %p307
      %p309 = scmp.ne.s32.totalorder %s301, %s303
      %p310 = scmp.eq.s32.totalorder %s36, 7
      %p311 = por %p309, %p310
      %p312 = scmp.ne.s32.totalorder %s303, %s304
      %p313 = scmp.eq.s32.totalorder %s36, 0
      %p314 = por %p312, %p313
      %p315 = scmp.ne.s32.totalorder %s303, %s304
      %p316 = scmp.eq.s32.totalorder %s37, 7
      %p317 = por %p315, %p316
      %p319 = scmp.ne.s32.totalorder %s304, %s318
      %p320 = scmp.eq.s32.totalorder %s37, 0
      %p321 = por %p319, %p320
      %s323 = sadd.s32 %s322, 1
      %p326 = scmp.eq.s32.totalorder %s31, 7
      %p327 = scmp.ne.s32.totalorder %s322, %s324
      %p328 = scmp.eq.s32.totalorder %s31, 0
      %p329 = por %p327, %p328
      %p330 = scmp.ne.s32.totalorder %s322, %s324
      %p331 = scmp.eq.s32.totalorder %s36, 7
      %p332 = por %p330, %p331
      %p333 = scmp.ne.s32.totalorder %s324, %s325
      %p334 = scmp.eq.s32.totalorder %s36, 0
      %p335 = por %p333, %p334
      %p336 = scmp.ne.s32.totalorder %s324, %s325
      %p337 = scmp.eq.s32.totalorder %s37, 7
      %p338 = por %p336, %p337
      %p340 = scmp.ne.s32.totalorder %s325, %s339
      %p341 = scmp.eq.s32.totalorder %s37, 0
      %p342 = por %p340, %p341
      %s344 = sadd.s32 %s343, 1
      %p347 = scmp.eq.s32.totalorder %s31, 7
      %p348 = scmp.ne.s32.totalorder %s343, %s345
      %p349 = scmp.eq.s32.totalorder %s31, 0
      %p350 = por %p348, %p349
      %p351 = scmp.ne.s32.totalorder %s343, %s345
      %p352 = scmp.eq.s32.totalorder %s36, 7
      %p353 = por %p351, %p352
      %p354 = scmp.ne.s32.totalorder %s345, %s346
      %p355 = scmp.eq.s32.totalorder %s36, 0
      %p356 = por %p354, %p355
      %p357 = scmp.ne.s32.totalorder %s345, %s346
      %p358 = scmp.eq.s32.totalorder %s37, 7
      %p359 = por %p357, %p358
      %p361 = scmp.ne.s32.totalorder %s346, %s360
      %p362 = scmp.eq.s32.totalorder %s37, 0
      %p363 = por %p361, %p362
      %s365 = sadd.s32 %s364, 1
      %p368 = scmp.eq.s32.totalorder %s31, 7
      %p369 = scmp.ne.s32.totalorder %s364, %s366
      %p370 = scmp.eq.s32.totalorder %s31, 0
      %p371 = por %p369, %p370
      %p372 = scmp.ne.s32.totalorder %s364, %s366
      %p373 = scmp.eq.s32.totalorder %s36, 7
      %p374 = por %p372, %p373
      %p375 = scmp.ne.s32.totalorder %s366, %s367
      %p376 = scmp.eq.s32.totalorder %s36, 0
      %p377 = por %p375, %p376
      %p378 = scmp.ne.s32.totalorder %s366, %s367
      %p379 = scmp.eq.s32.totalorder %s37, 7
      %p380 = por %p378, %p379
      %p382 = scmp.ne.s32.totalorder %s367, %s381
      %p383 = scmp.eq.s32.totalorder %s37, 0
      %p384 = por %p382, %p383
      %s386 = sadd.s32 %s385, 1
      %p389 = scmp.eq.s32.totalorder %s31, 7
      %p390 = scmp.ne.s32.totalorder %s385, %s387
      %p391 = scmp.eq.s32.totalorder %s31, 0
      %p392 = por %p390, %p391
      %p393 = scmp.ne.s32.totalorder %s385, %s387
      %p394 = scmp.eq.s32.totalorder %s36, 7
      %p395 = por %p393, %p394
      %p396 = scmp.ne.s32.totalorder %s387, %s388
      %p397 = scmp.eq.s32.totalorder %s36, 0
      %p398 = por %p396, %p397
      %p399 = scmp.ne.s32.totalorder %s387, %s388
      %p400 = scmp.eq.s32.totalorder %s37, 7
      %p401 = por %p399, %p400
      %p403 = scmp.ne.s32.totalorder %s388, %s402
      %p404 = scmp.eq.s32.totalorder %s37, 0
      %p405 = por %p403, %p404
      %s407 = sadd.s32 %s406, 1
      %p410 = scmp.eq.s32.totalorder %s31, 7
      %p411 = scmp.ne.s32.totalorder %s406, %s408
      %p412 = scmp.eq.s32.totalorder %s31, 0
      %p413 = por %p411, %p412
      %p414 = scmp.ne.s32.totalorder %s406, %s408
      %p415 = scmp.eq.s32.totalorder %s36, 7
      %p416 = por %p414, %p415
      %p417 = scmp.ne.s32.totalorder %s408, %s409
      %p418 = scmp.eq.s32.totalorder %s36, 0
      %p419 = por %p417, %p418
      %p420 = scmp.ne.s32.totalorder %s408, %s409
      %p421 = scmp.eq.s32.totalorder %s37, 7
      %p422 = por %p420, %p421
      %p424 = scmp.ne.s32.totalorder %s409, %s423
      %p425 = scmp.eq.s32.totalorder %s37, 0
      %p426 = por %p424, %p425
      %s428 = sadd.s32 %s427, 1
      %p431 = scmp.eq.s32.totalorder %s31, 7
      %p432 = scmp.ne.s32.totalorder %s427, %s429
      %p433 = scmp.eq.s32.totalorder %s31, 0
      %p434 = por %p432, %p433
      %p435 = scmp.ne.s32.totalorder %s427, %s429
      %p436 = scmp.eq.s32.totalorder %s36, 7
      %p437 = por %p435, %p436
      %p438 = scmp.ne.s32.totalorder %s429, %s430
      %p439 = scmp.eq.s32.totalorder %s36, 0
      %p440 = por %p438, %p439
      %p441 = scmp.ne.s32.totalorder %s429, %s430
      %p442 = scmp.eq.s32.totalorder %s37, 7
      %p443 = por %p441, %p442
      %p445 = scmp.ne.s32.totalorder %s430, %s444
      %p446 = scmp.eq.s32.totalorder %s37, 0
      %p447 = por %p445, %p446
      %s448 = ssub.s32 %s38, %s50
      %p449 = scmp.eq.s32.totalorder %s448, 0
      %s451 = sadd.s32 %s450, 1
      %s452 = scalar_select %p449, %s450, %s451
      %p455 = pneg %p449
      %p456 = scmp.eq.s32.totalorder %s31, 7
      %p457 = por %p455, %p456
      %p458 = scmp.ne.s32.totalorder %s450, %s453
      %p459 = scmp.eq.s32.totalorder %s31, 0
      %p460 = por %p458, %p459
      %p461 = scmp.ne.s32.totalorder %s450, %s453
      %p462 = scmp.eq.s32.totalorder %s36, 7
      %p463 = por %p461, %p462
      %p464 = scmp.ne.s32.totalorder %s453, %s454
      %p465 = scmp.eq.s32.totalorder %s36, 0
      %p466 = por %p464, %p465
      %p467 = scmp.ne.s32.totalorder %s453, %s454
      %p468 = scmp.eq.s32.totalorder %s37, 7
      %p469 = por %p467, %p468
      %p471 = scmp.ne.s32.totalorder %s454, %s470
      %p472 = scmp.eq.s32.totalorder %s37, 0
      %p473 = por %p471, %p472
      %s474 = ssub.s32 %s39, %s46
      %s475 = ssub.s32 %s38, %s50
      %s476 = sor.u32 %s474, %s475
      %p477 = scmp.eq.s32.totalorder %s476, 0
      %s479 = sadd.s32 %s478, 1
      %s480 = scalar_select %p477, %s478, %s479
      %p483 = pneg %p477
      %p484 = scmp.eq.s32.totalorder %s31, 7
      %p485 = por %p483, %p484
      %p486 = scmp.ne.s32.totalorder %s478, %s481
      %p487 = scmp.eq.s32.totalorder %s31, 0
      %p488 = por %p486, %p487
      %p489 = scmp.ne.s32.totalorder %s478, %s481
      %p490 = scmp.eq.s32.totalorder %s36, 7
      %p491 = por %p489, %p490
      %p492 = scmp.ne.s32.totalorder %s481, %s482
      %p493 = scmp.eq.s32.totalorder %s36, 0
      %p494 = por %p492, %p493
      %p495 = scmp.ne.s32.totalorder %s481, %s482
      %p496 = scmp.eq.s32.totalorder %s37, 7
      %p497 = por %p495, %p496
      %p499 = scmp.ne.s32.totalorder %s482, %s498
      %p500 = scmp.eq.s32.totalorder %s37, 0
      %p501 = por %p499, %p500
      %p502 = scmp.le.s32.totalorder 1, %s31
      %p503 = scmp.lt.s32.totalorder %s31, 9
      %p504 = pnand %p502, %p503
      %p505 = pneg %p504
      // Predicated region
      $region9: #{tpu_custom_call.1} parent=5 // pred_check
        _
      $region10: #{tpu_custom_call.1} parent=5 // pred_check_branch
        %507 = sbr.rel (%p504) target = $region12
      $region11: #{tpu_custom_call.1} parent=5 // pred_region
        %s508 = ssub.s32 %s31, 1
        // Predicated region
        $region13: #{tpu_custom_call.1} parent=11 // pred_check
          %p509 = pneg %p272
        $region14: #{tpu_custom_call.1} parent=11 // pred_check_branch
          %511 = sbr.rel (%p509) target = $region16
        $region15: #{tpu_custom_call.1} parent=11 // pred_region
          _
        $region16: #{tpu_custom_call.1} parent=11 // pred_fallthru
          _
        // Predicated region
        $region17: #{tpu_custom_call.1} parent=11 // pred_check
          %p512 = pneg %p293
        $region18: #{tpu_custom_call.1} parent=11 // pred_check_branch
          %514 = sbr.rel (%p512) target = $region20
        $region19: #{tpu_custom_call.1} parent=11 // pred_region
          _
        $region20: #{tpu_custom_call.1} parent=11 // pred_fallthru
          _
        // Predicated region
        $region21: #{tpu_custom_call.1} parent=11 // pred_check
          %p515 = pneg %p314
        $region22: #{tpu_custom_call.1} parent=11 // pred_check_branch
          %517 = sbr.rel (%p515) target = $region24
        $region23: #{tpu_custom_call.1} parent=11 // pred_region
          _
        $region24: #{tpu_custom_call.1} parent=11 // pred_fallthru
          _
        // Predicated region
        $region25: #{tpu_custom_call.1} parent=11 // pred_check
          %p518 = pneg %p335
        $region26: #{tpu_custom_call.1} parent=11 // pred_check_branch
          %520 = sbr.rel (%p518) target = $region28
        $region27: #{tpu_custom_call.1} parent=11 // pred_region
          _
        $region28: #{tpu_custom_call.1} parent=11 // pred_fallthru
          _
        // Predicated region
        $region29: #{tpu_custom_call.1} parent=11 // pred_check
          %p521 = pneg %p356
        $region30: #{tpu_custom_call.1} parent=11 // pred_check_branch
          %523 = sbr.rel (%p521) target = $region32
        $region31: #{tpu_custom_call.1} parent=11 // pred_region
          _
        $region32: #{tpu_custom_call.1} parent=11 // pred_fallthru
          _
        // Predicated region
        $region33: #{tpu_custom_call.1} parent=11 // pred_check
          %p524 = pneg %p377
        $region34: #{tpu_custom_call.1} parent=11 // pred_check_branch
          %526 = sbr.rel (%p524) target = $region36
        $region35: #{tpu_custom_call.1} parent=11 // pred_region
          _
        $region36: #{tpu_custom_call.1} parent=11 // pred_fallthru
          _
        // Predicated region
        $region37: #{tpu_custom_call.1} parent=11 // pred_check
          %p527 = pneg %p398
        $region38: #{tpu_custom_call.1} parent=11 // pred_check_branch
          %529 = sbr.rel (%p527) target = $region40
        $region39: #{tpu_custom_call.1} parent=11 // pred_region
          _
        $region40: #{tpu_custom_call.1} parent=11 // pred_fallthru
          _
        // Predicated region
        $region41: #{tpu_custom_call.1} parent=11 // pred_check
          %p530 = pneg %p419
        $region42: #{tpu_custom_call.1} parent=11 // pred_check_branch
          %532 = sbr.rel (%p530) target = $region44
        $region43: #{tpu_custom_call.1} parent=11 // pred_region
          _
        $region44: #{tpu_custom_call.1} parent=11 // pred_fallthru
          _
        // Predicated region
        $region45: #{tpu_custom_call.1} parent=11 // pred_check
          %p533 = pneg %p440
        $region46: #{tpu_custom_call.1} parent=11 // pred_check_branch
          %535 = sbr.rel (%p533) target = $region48
        $region47: #{tpu_custom_call.1} parent=11 // pred_region
          _
        $region48: #{tpu_custom_call.1} parent=11 // pred_fallthru
          _
      $region12: #{tpu_custom_call.1} parent=5 // pred_fallthru
        _
      %p536 = scmp.lt.s32.totalorder %s31, 8
      // Predicated region
      $region49: #{tpu_custom_call.1} parent=5 // pred_check
        %p537 = pneg %p536
      $region50: #{tpu_custom_call.1} parent=5 // pred_check_branch
        %539 = sbr.rel (%p537) target = $region52
      $region51: #{tpu_custom_call.1} parent=5 // pred_region
        // Predicated region
        $region53: #{tpu_custom_call.1} parent=51 // pred_check
          %p540 = pneg %p63
        $region54: #{tpu_custom_call.1} parent=51 // pred_check_branch
          %542 = sbr.rel (%p540) target = $region56
        $region55: #{tpu_custom_call.1} parent=51 // pred_region
          %p543 = scmp.lt.s32.totalorder %s38, 1
          %s544 = scalar_select %p543, %s38, 1
          %s545 = smul.addr %s544, 8
          %s546 = scalar_lea.vmem %s0, %s545
        $region56: #{tpu_custom_call.1} parent=51 // pred_fallthru
          _
        // Predicated region
        $region57: #{tpu_custom_call.1} parent=51 // pred_check
          %p547 = pneg %p89
        $region58: #{tpu_custom_call.1} parent=51 // pred_check_branch
          %549 = sbr.rel (%p547) target = $region60
        $region59: #{tpu_custom_call.1} parent=51 // pred_region
          %p550 = scmp.lt.s32.totalorder %s39, 3
          %s551 = scalar_select %p550, %s39, 3
          %s552 = smul.addr %s551, 4
          %s553 = smul.addr %s552, 4
          %s554 = scalar_lea.vmem %s1, %s553
        $region60: #{tpu_custom_call.1} parent=51 // pred_fallthru
          _
        // Predicated region
        $region61: #{tpu_custom_call.1} parent=51 // pred_check
          %p555 = pneg %p115
        $region62: #{tpu_custom_call.1} parent=51 // pred_check_branch
          %557 = sbr.rel (%p555) target = $region64
        $region63: #{tpu_custom_call.1} parent=51 // pred_region
          %p558 = scmp.lt.s32.totalorder %s39, 3
          %s559 = scalar_select %p558, %s39, 3
          %s560 = scalar_lea.vmem %s2, %s559
        $region64: #{tpu_custom_call.1} parent=51 // pred_fallthru
          _
        // Predicated region
        $region65: #{tpu_custom_call.1} parent=51 // pred_check
          %p561 = pneg %p141
        $region66: #{tpu_custom_call.1} parent=51 // pred_check_branch
          %563 = sbr.rel (%p561) target = $region68
        $region67: #{tpu_custom_call.1} parent=51 // pred_region
          %p564 = scmp.lt.s32.totalorder %s39, 3
          %s565 = scalar_select %p564, %s39, 3
          %s566 = smul.addr %s565, 4
          %s567 = smul.addr %s566, 4
          %s568 = scalar_lea.vmem %s3, %s567
        $region68: #{tpu_custom_call.1} parent=51 // pred_fallthru
          _
        // Predicated region
        $region69: #{tpu_custom_call.1} parent=51 // pred_check
          %p569 = pneg %p167
        $region70: #{tpu_custom_call.1} parent=51 // pred_check_branch
          %571 = sbr.rel (%p569) target = $region72
        $region71: #{tpu_custom_call.1} parent=51 // pred_region
          %p572 = scmp.lt.s32.totalorder %s39, 3
          %s573 = scalar_select %p572, %s39, 3
          %s574 = scalar_lea.vmem %s4, %s573
        $region72: #{tpu_custom_call.1} parent=51 // pred_fallthru
          _
        // Predicated region
        $region73: #{tpu_custom_call.1} parent=51 // pred_check
          %p575 = pneg %p193
        $region74: #{tpu_custom_call.1} parent=51 // pred_check_branch
          %577 = sbr.rel (%p575) target = $region76
        $region75: #{tpu_custom_call.1} parent=51 // pred_region
          %p578 = scmp.lt.s32.totalorder %s39, 3
          %s579 = scalar_select %p578, %s39, 3
          %s580 = smul.addr %s579, 4
          %s581 = smul.addr %s580, 4
          %s582 = scalar_lea.vmem %s5, %s581
        $region76: #{tpu_custom_call.1} parent=51 // pred_fallthru
          _
        // Predicated region
        $region77: #{tpu_custom_call.1} parent=51 // pred_check
          %p583 = pneg %p219
        $region78: #{tpu_custom_call.1} parent=51 // pred_check_branch
          %585 = sbr.rel (%p583) target = $region80
        $region79: #{tpu_custom_call.1} parent=51 // pred_region
          %p586 = scmp.lt.s32.totalorder %s39, 3
          %s587 = scalar_select %p586, %s39, 3
          %s588 = scalar_lea.vmem %s6, %s587
        $region80: #{tpu_custom_call.1} parent=51 // pred_fallthru
          _
        // Predicated region
        $region81: #{tpu_custom_call.1} parent=51 // pred_check
          %p589 = pneg %p245
        $region82: #{tpu_custom_call.1} parent=51 // pred_check_branch
          %591 = sbr.rel (%p589) target = $region84
        $region83: #{tpu_custom_call.1} parent=51 // pred_region
          %p592 = scmp.lt.s32.totalorder %s39, 3
          %s593 = scalar_select %p592, %s39, 3
          %s594 = smul.addr %s593, 4
          %s595 = scalar_lea.vmem %s7, %s594
        $region84: #{tpu_custom_call.1} parent=51 // pred_fallthru
          _
      $region52: #{tpu_custom_call.1} parent=5 // pred_fallthru
        _
      %p596 = scmp.le.s32.totalorder 1, %s31
      %p597 = scmp.lt.s32.totalorder %s31, 9
      %p598 = pnand %p596, %p597
      %p599 = pneg %p598
      // Predicated region
      $region85: #{tpu_custom_call.1} parent=5 // pred_check
        _
      $region86: #{tpu_custom_call.1} parent=5 // pred_check_branch
        %601 = sbr.rel (%p598) target = $region88
      $region87: #{tpu_custom_call.1} parent=5 // pred_region
        %s602 = ssub.s32 %s31, 1
        %p603 = scmp.lt.s32.totalorder %s40, 1
        %s604 = scalar_select %p603, %s40, 1
        %s605 = smul.addr %s604, 8
        %s606 = scalar_lea.vmem %s0, %s605
        %p607 = pneg %p69
        %p608 = pneg %p66
        %p609 = scmp.lt.s32.totalorder %s41, 3
        %s610 = scalar_select %p609, %s41, 3
        %s611 = smul.addr %s610, 4
        %s612 = smul.addr %s611, 4
        %s613 = scalar_lea.vmem %s1, %s612
        %p614 = pneg %p95
        %p615 = pneg %p92
        %p616 = scmp.lt.s32.totalorder %s41, 3
        %s617 = scalar_select %p616, %s41, 3
        %s618 = scalar_lea.vmem %s2, %s617
        %p619 = pneg %p121
        %p620 = pneg %p118
        %p621 = scmp.lt.s32.totalorder %s41, 3
        %s622 = scalar_select %p621, %s41, 3
        %s623 = smul.addr %s622, 4
        %s624 = smul.addr %s623, 4
        %s625 = scalar_lea.vmem %s3, %s624
        %p626 = pneg %p147
        %p627 = pneg %p144
        %p628 = scmp.lt.s32.totalorder %s41, 3
        %s629 = scalar_select %p628, %s41, 3
        %s630 = scalar_lea.vmem %s4, %s629
        %p631 = pneg %p173
        %p632 = pneg %p170
        %p633 = scmp.lt.s32.totalorder %s41, 3
        %s634 = scalar_select %p633, %s41, 3
        %s635 = smul.addr %s634, 4
        %s636 = smul.addr %s635, 4
        %s637 = scalar_lea.vmem %s5, %s636
        %p638 = pneg %p199
        %p639 = pneg %p196
        %p640 = scmp.lt.s32.totalorder %s41, 3
        %s641 = scalar_select %p640, %s41, 3
        %s642 = scalar_lea.vmem %s6, %s641
        %p643 = pneg %p225
        %p644 = pneg %p222
        %p645 = scmp.lt.s32.totalorder %s41, 3
        %s646 = scalar_select %p645, %s41, 3
        %s647 = smul.addr %s646, 4
        %s648 = scalar_lea.vmem %s7, %s647
        %p649 = pneg %p251
        %p650 = pneg %p248
        %p651 = pneg %p272
        %p652 = pneg %p269
        %p653 = pneg %p293
        %p654 = pneg %p290
        %p655 = pneg %p314
        %p656 = pneg %p311
        %p657 = pneg %p335
        %p658 = pneg %p332
        %p659 = pneg %p356
        %p660 = pneg %p353
        %p661 = pneg %p377
        %p662 = pneg %p374
        %p663 = pneg %p398
        %p664 = pneg %p395
        %p665 = pneg %p419
        %p666 = pneg %p416
        %p667 = pneg %p440
        %p668 = pneg %p437
        %p669 = pneg %p466
        %p670 = pneg %p463
        %s671 = sand.u32 %s453, 1
        %s672 = scalar_lea.sflag [#allocation4], %s671
        %s673 = sand.u32 %s453, 1
        %s674 = smul.addr %s673, 8
        %s675 = scalar_lea.vmem [#allocation3], %s674
        %p676 = pneg %p494
        %p677 = pneg %p491
        %s678 = sand.u32 %s481, 1
        %s679 = scalar_lea.sflag [#allocation6], %s678
        %s680 = sand.u32 %s481, 1
        %s681 = smul.addr %s680, 8
        %s682 = scalar_lea.vmem [#allocation5], %s681
        %p683 = scmp.lt.s32.totalorder %s40, 1
        %s684 = scalar_select %p683, %s40, 1
        %s685 = smul.addr %s684, 8
        %s686 = scalar_lea.vmem %s0, %s685
        %p687 = scmp.lt.s32.totalorder %s41, 3
        %s688 = scalar_select %p687, %s41, 3
        %s689 = smul.addr %s688, 4
        %s690 = smul.addr %s689, 4
        %s691 = scalar_lea.vmem %s1, %s690
        %p692 = scmp.lt.s32.totalorder %s41, 3
        %s693 = scalar_select %p692, %s41, 3
        %s694 = scalar_lea.vmem %s2, %s693
        %p695 = scmp.lt.s32.totalorder %s41, 3
        %s696 = scalar_select %p695, %s41, 3
        %s697 = smul.addr %s696, 4
        %s698 = smul.addr %s697, 4
        %s699 = scalar_lea.vmem %s3, %s698
        %p700 = scmp.lt.s32.totalorder %s41, 3
        %s701 = scalar_select %p700, %s41, 3
        %s702 = scalar_lea.vmem %s4, %s701
        %p703 = scmp.lt.s32.totalorder %s41, 3
        %s704 = scalar_select %p703, %s41, 3
        %s705 = smul.addr %s704, 4
        %s706 = smul.addr %s705, 4
        %s707 = scalar_lea.vmem %s5, %s706
        %p708 = scmp.lt.s32.totalorder %s41, 3
        %s709 = scalar_select %p708, %s41, 3
        %s710 = scalar_lea.vmem %s6, %s709
        %p711 = scmp.lt.s32.totalorder %s41, 3
        %s712 = scalar_select %p711, %s41, 3
        %s713 = smul.addr %s712, 4
        %s714 = scalar_lea.vmem %s7, %s713
        %v716 = vld [vmem:[%s686] sm:$0xff]
        %v717 = vpack.c.bf16 %v716, %v716
        %v718 = vld [vmem:[%s691] sm:$0xf]
        %v719 = vld [vmem:[%s691 + $0x4] sm:$0xf]
        %v720 = vld [vmem:[%s691 + $0x8] sm:$0xf]
        %v721 = vld [vmem:[%s691 + $0xc] sm:$0xf]
        %v722 = vld [vmem:[%s694] sm:$0x1]
        %v724 = vlaneseq
        %v725 = vshrl.u32 %v724, 7
        %v726 = vsub.s32 0, %v725
        %v727 = vrot.slane %v722, %v726
        %v733 = vunpack.c.l.b16 %v718
        %v734 = vunpack.c.l.b16 %v719
        %v735 = vunpack.c.l.b16 %v720
        %v736 = vunpack.c.l.b16 %v721
        %v737 = vpack.c.b16 %v734, %v733
        %v738 = vpack.c.b16 %v736, %v735
        %vm741 = vcmask 261120
        %v743 = vsel %vm741, %v717, 0
        %745 = vmatprep.subr.bf16.mxu0 0
        %746 = vmatpush1.bf16.msra.mxu0 %v737
        %747 = vmatprep.subr.bf16.mxu0 0
        %748 = vmatpush1.bf16.msra.mxu0 %v738
        %749 = vmatprep.subr.bf16.mxu0 0
        %750 = vmatpush1.bf16.msra.mxu0 0
        %751 = vmatprep.subr.bf16.mxu0 0
        %752 = vmatpush1.bf16.msra.mxu0 0
        %753 = vmatprep.subr.bf16.mxu0 0
        %754 = vmatpush1.bf16.msra.mxu0 0
        %755 = vmatprep.subr.bf16.mxu0 0
        %756 = vmatpush1.bf16.msra.mxu0 0
        %757 = vmatprep.subr.bf16.mxu0 0
        %758 = vmatpush1.bf16.msra.mxu0 0
        %759 = vmatprep.subr.bf16.mxu0 0
        %760 = vmatpush1.bf16.msra.mxu0 0
        %761 = vmatprep.subr.bf16.mxu0 0
        %762 = vmatpush1.bf16.msra.mxu0 0
        %763 = vmatprep.subr.bf16.mxu0 0
        %764 = vmatpush1.bf16.msra.mxu0 0
        %765 = vmatprep.subr.bf16.mxu0 0
        %766 = vmatpush1.bf16.msra.mxu0 0
        %767 = vmatprep.subr.bf16.mxu0 0
        %768 = vmatpush1.bf16.msra.mxu0 0
        %769 = vmatprep.subr.bf16.mxu0 0
        %770 = vmatpush1.bf16.msra.mxu0 0
        %771 = vmatprep.subr.bf16.mxu0 0
        %772 = vmatpush1.bf16.msra.mxu0 0
        %773 = vmatprep.subr.bf16.mxu0 0
        %774 = vmatpush1.bf16.msra.mxu0 0
        %775 = vmatprep.subr.bf16.mxu0 0
        %776 = vmatpush1.bf16.msra.mxu0 0
        %777 = vmatprep.mubr.bf16.mxu0 0
        %778 = vmatmul.mubr.bf16.gmra.mrb[0].mxu0 %v743
        %v779 = vpop.f32.mrb[0].mxu0
        %v780 = vadd.f32 %v727, %v779
        %v781 = vpop.f32.mrb[0].mxu0
        %v782 = vpop.f32.mrb[0].mxu0
        %v783 = vpop.f32.mrb[0].mxu0
        %784 = vdwg.mxu0
        %v785 = vld [vmem:[%s699] sm:$0xf]
        %v786 = vld [vmem:[%s699 + $0x4] sm:$0xf]
        %v787 = vld [vmem:[%s699 + $0x8] sm:$0xf]
        %v788 = vld [vmem:[%s699 + $0xc] sm:$0xf]
        %v789 = vld [vmem:[%s702] sm:$0x1]
        %v791 = vlaneseq
        %v792 = vshrl.u32 %v791, 7
        %v793 = vsub.s32 0, %v792
        %v794 = vrot.slane %v789, %v793
        %v800 = vunpack.c.l.b16 %v785
        %v801 = vunpack.c.l.b16 %v786
        %v802 = vunpack.c.l.b16 %v787
        %v803 = vunpack.c.l.b16 %v788
        %v804 = vpack.c.b16 %v801, %v800
        %v805 = vpack.c.b16 %v803, %v802
        %808 = vmatprep.subr.bf16.mxu0 0
        %809 = vmatpush1.bf16.msra.mxu0 %v804
        %810 = vmatprep.subr.bf16.mxu0 0
        %811 = vmatpush1.bf16.msra.mxu0 %v805
        %812 = vmatprep.subr.bf16.mxu0 0
        %813 = vmatpush1.bf16.msra.mxu0 0
        %814 = vmatprep.subr.bf16.mxu0 0
        %815 = vmatpush1.bf16.msra.mxu0 0
        %816 = vmatprep.subr.bf16.mxu0 0
        %817 = vmatpush1.bf16.msra.mxu0 0
        %818 = vmatprep.subr.bf16.mxu0 0
        %819 = vmatpush1.bf16.msra.mxu0 0
        %820 = vmatprep.subr.bf16.mxu0 0
        %821 = vmatpush1.bf16.msra.mxu0 0
        %822 = vmatprep.subr.bf16.mxu0 0
        %823 = vmatpush1.bf16.msra.mxu0 0
        %824 = vmatprep.subr.bf16.mxu0 0
        %825 = vmatpush1.bf16.msra.mxu0 0
        %826 = vmatprep.subr.bf16.mxu0 0
        %827 = vmatpush1.bf16.msra.mxu0 0
        %828 = vmatprep.subr.bf16.mxu0 0
        %829 = vmatpush1.bf16.msra.mxu0 0
        %830 = vmatprep.subr.bf16.mxu0 0
        %831 = vmatpush1.bf16.msra.mxu0 0
        %832 = vmatprep.subr.bf16.mxu0 0
        %833 = vmatpush1.bf16.msra.mxu0 0
        %834 = vmatprep.subr.bf16.mxu0 0
        %835 = vmatpush1.bf16.msra.mxu0 0
        %836 = vmatprep.subr.bf16.mxu0 0
        %837 = vmatpush1.bf16.msra.mxu0 0
        %838 = vmatprep.subr.bf16.mxu0 0
        %839 = vmatpush1.bf16.msra.mxu0 0
        %840 = vmatprep.mubr.bf16.mxu0 0
        %841 = vmatmul.mubr.bf16.gmra.mrb[0].mxu0 %v743
        %v842 = vpop.f32.mrb[0].mxu0
        %v843 = vadd.f32 %v794, %v842
        %v844 = vpop.f32.mrb[0].mxu0
        %v845 = vpop.f32.mrb[0].mxu0
        %v846 = vpop.f32.mrb[0].mxu0
        %847 = vdwg.mxu0
        %v848 = vld [vmem:[%s707] sm:$0xf]
        %v849 = vld [vmem:[%s707 + $0x4] sm:$0xf]
        %v850 = vld [vmem:[%s707 + $0x8] sm:$0xf]
        %v851 = vld [vmem:[%s707 + $0xc] sm:$0xf]
        %v852 = vld [vmem:[%s710] sm:$0x1]
        %v854 = vlaneseq
        %v855 = vshrl.u32 %v854, 7
        %v856 = vsub.s32 0, %v855
        %v857 = vrot.slane %v852, %v856
        %v863 = vunpack.c.l.b16 %v848
        %v864 = vunpack.c.l.b16 %v849
        %v865 = vunpack.c.l.b16 %v850
        %v866 = vunpack.c.l.b16 %v851
        %v867 = vpack.c.b16 %v864, %v863
        %v868 = vpack.c.b16 %v866, %v865
        %871 = vmatprep.subr.bf16.mxu0 0
        %872 = vmatpush1.bf16.msra.mxu0 %v867
        %873 = vmatprep.subr.bf16.mxu0 0
        %874 = vmatpush1.bf16.msra.mxu0 %v868
        %875 = vmatprep.subr.bf16.mxu0 0
        %876 = vmatpush1.bf16.msra.mxu0 0
        %877 = vmatprep.subr.bf16.mxu0 0
        %878 = vmatpush1.bf16.msra.mxu0 0
        %879 = vmatprep.subr.bf16.mxu0 0
        %880 = vmatpush1.bf16.msra.mxu0 0
        %881 = vmatprep.subr.bf16.mxu0 0
        %882 = vmatpush1.bf16.msra.mxu0 0
        %883 = vmatprep.subr.bf16.mxu0 0
        %884 = vmatpush1.bf16.msra.mxu0 0
        %885 = vmatprep.subr.bf16.mxu0 0
        %886 = vmatpush1.bf16.msra.mxu0 0
        %887 = vmatprep.subr.bf16.mxu0 0
        %888 = vmatpush1.bf16.msra.mxu0 0
        %889 = vmatprep.subr.bf16.mxu0 0
        %890 = vmatpush1.bf16.msra.mxu0 0
        %891 = vmatprep.subr.bf16.mxu0 0
        %892 = vmatpush1.bf16.msra.mxu0 0
        %893 = vmatprep.subr.bf16.mxu0 0
        %894 = vmatpush1.bf16.msra.mxu0 0
        %895 = vmatprep.subr.bf16.mxu0 0
        %896 = vmatpush1.bf16.msra.mxu0 0
        %897 = vmatprep.subr.bf16.mxu0 0
        %898 = vmatpush1.bf16.msra.mxu0 0
        %899 = vmatprep.subr.bf16.mxu0 0
        %900 = vmatpush1.bf16.msra.mxu0 0
        %901 = vmatprep.subr.bf16.mxu0 0
        %902 = vmatpush1.bf16.msra.mxu0 0
        %903 = vmatprep.mubr.bf16.mxu0 0
        %904 = vmatmul.mubr.bf16.gmra.mrb[0].mxu0 %v743
        %v905 = vpop.f32.mrb[0].mxu0
        %v906 = vadd.f32 %v857, %v905
        %v907 = vpop.f32.mrb[0].mxu0
        %v908 = vpop.f32.mrb[0].mxu0
        %v909 = vpop.f32.mrb[0].mxu0
        %910 = vdwg.mxu0
        %v911 = vpack.c.bf16 %v780, %v780
        %v912 = vpack.c.bf16 %v843, %v843
        %vm913 = vcmask 64512
        %v915 = vsel %vm913, %v911, 0
        %v918 = vsel %vm913, %v912, 0
        %920 = vmatprep.subr.bf16.mxu0 0
        %921 = vmatpush1.bf16.xpose.msra.mxu0 %v918
        %922 = vmatprep.subr.bf16.mxu0 0
        %923 = vmatpush1.bf16.xpose.msra.mxu0 0
        %924 = vmatprep.subr.bf16.mxu0 0
        %925 = vmatpush1.bf16.xpose.msra.mxu0 0
        %926 = vmatprep.subr.bf16.mxu0 0
        %927 = vmatpush1.bf16.xpose.msra.mxu0 0
        %928 = vmatprep.subr.bf16.mxu0 0
        %929 = vmatpush1.bf16.xpose.msra.mxu0 0
        %930 = vmatprep.subr.bf16.mxu0 0
        %931 = vmatpush1.bf16.xpose.msra.mxu0 0
        %932 = vmatprep.subr.bf16.mxu0 0
        %933 = vmatpush1.bf16.xpose.msra.mxu0 0
        %934 = vmatprep.subr.bf16.mxu0 0
        %935 = vmatpush1.bf16.xpose.msra.mxu0 0
        %936 = vmatprep.subr.bf16.mxu0 0
        %937 = vmatpush1.bf16.xpose.msra.mxu0 0
        %938 = vmatprep.subr.bf16.mxu0 0
        %939 = vmatpush1.bf16.xpose.msra.mxu0 0
        %940 = vmatprep.subr.bf16.mxu0 0
        %941 = vmatpush1.bf16.xpose.msra.mxu0 0
        %942 = vmatprep.subr.bf16.mxu0 0
        %943 = vmatpush1.bf16.xpose.msra.mxu0 0
        %944 = vmatprep.subr.bf16.mxu0 0
        %945 = vmatpush1.bf16.xpose.msra.mxu0 0
        %946 = vmatprep.subr.bf16.mxu0 0
        %947 = vmatpush1.bf16.xpose.msra.mxu0 0
        %948 = vmatprep.subr.bf16.mxu0 0
        %949 = vmatpush1.bf16.xpose.msra.mxu0 0
        %950 = vmatprep.subr.bf16.mxu0 0
        %951 = vmatpush1.bf16.xpose.msra.mxu0 0
        %952 = vmatprep.mubr.bf16.mxu0 0
        %953 = vmatmul.mubr.bf16.gmra.mrb[0].mxu0 %v915
        %v954 = vpop.f32.mrb[0].mxu0
        %v955 = vadd.f32 0.0, %v954
        %v956 = vpop.f32.mrb[0].mxu0
        %v957 = vpop.f32.mrb[0].mxu0
        %v958 = vpop.f32.mrb[0].mxu0
        %959 = vdwg.mxu0
        %v960 = vmul.f32 %v955, 0.35355338
        %v961 = vsel %vm913, %v960, -inf
        %962 = vmax.xlane.f32.xlu0 %v961
        %v963 = vpop.xlane.xlu0 %962
        %v964 = vsub.f32 %v960, %v963
        %v965 = vmul.f32 %v964, 1.442695
        %v966 = vpow.pop %v965
        %v967 = vsel %vm913, %v966, 0.0
        %968 = vadd.xlane.f32.xlu0 %v967
        %v969 = vpop.xlane.xlu0 %968
        %v970 = vrcp.pop %v969
        %v971 = vmul.f32 %v966, %v970
        %972 = vst.msk [vmem:[%s682] sm:$0xff] %vm913, %v971
        %v973 = vpack.c.bf16 %v971, %v971
        %v974 = vpack.c.bf16 %v906, %v906
        %v976 = vsel %vm913, %v973, 0
        %vm978 = vcmask 1043456
        %v980 = vsel %vm978, %v974, 0
        %982 = vmatprep.subr.bf16.mxu0 0
        %983 = vmatpush1.bf16.msra.mxu0 %v980
        %984 = vmatprep.subr.bf16.mxu0 0
        %985 = vmatpush1.bf16.msra.mxu0 0
        %986 = vmatprep.subr.bf16.mxu0 0
        %987 = vmatpush1.bf16.msra.mxu0 0
        %988 = vmatprep.subr.bf16.mxu0 0
        %989 = vmatpush1.bf16.msra.mxu0 0
        %990 = vmatprep.subr.bf16.mxu0 0
        %991 = vmatpush1.bf16.msra.mxu0 0
        %992 = vmatprep.subr.bf16.mxu0 0
        %993 = vmatpush1.bf16.msra.mxu0 0
        %994 = vmatprep.subr.bf16.mxu0 0
        %995 = vmatpush1.bf16.msra.mxu0 0
        %996 = vmatprep.subr.bf16.mxu0 0
        %997 = vmatpush1.bf16.msra.mxu0 0
        %998 = vmatprep.subr.bf16.mxu0 0
        %999 = vmatpush1.bf16.msra.mxu0 0
        %1000 = vmatprep.subr.bf16.mxu0 0
        %1001 = vmatpush1.bf16.msra.mxu0 0
        %1002 = vmatprep.subr.bf16.mxu0 0
        %1003 = vmatpush1.bf16.msra.mxu0 0
        %1004 = vmatprep.subr.bf16.mxu0 0
        %1005 = vmatpush1.bf16.msra.mxu0 0
        %1006 = vmatprep.subr.bf16.mxu0 0
        %1007 = vmatpush1.bf16.msra.mxu0 0
        %1008 = vmatprep.subr.bf16.mxu0 0
        %1009 = vmatpush1.bf16.msra.mxu0 0
        %1010 = vmatprep.subr.bf16.mxu0 0
        %1011 = vmatpush1.bf16.msra.mxu0 0
        %1012 = vmatprep.subr.bf16.mxu0 0
        %1013 = vmatpush1.bf16.msra.mxu0 0
        %1014 = vmatprep.mubr.bf16.mxu0 0
        %1015 = vmatmul.mubr.bf16.gmra.mrb[0].mxu0 %v976
        %v1016 = vpop.f32.mrb[0].mxu0
        %v1017 = vadd.f32 0.0, %v1016
        %v1018 = vpop.f32.mrb[0].mxu0
        %v1019 = vpop.f32.mrb[0].mxu0
        %v1020 = vpop.f32.mrb[0].mxu0
        %1021 = vdwg.mxu0
        %v1022 = vpack.c.bf16 %v1017, %v1017
        %v1023 = vld [vmem:[%s714] sm:$0xf]
        %v1025 = vsel %vm913, %v1022, 0
        %v1028 = vsel %vm978, %v1023, 0
        %1030 = vmatprep.subr.bf16.mxu0 0
        %1031 = vmatpush1.bf16.msra.mxu0 %v1028
        %1032 = vmatprep.subr.bf16.mxu0 0
        %1033 = vmatpush1.bf16.msra.mxu0 0
        %1034 = vmatprep.subr.bf16.mxu0 0
        %1035 = vmatpush1.bf16.msra.mxu0 0
        %1036 = vmatprep.subr.bf16.mxu0 0
        %1037 = vmatpush1.bf16.msra.mxu0 0
        %1038 = vmatprep.subr.bf16.mxu0 0
        %1039 = vmatpush1.bf16.msra.mxu0 0
        %1040 = vmatprep.subr.bf16.mxu0 0
        %1041 = vmatpush1.bf16.msra.mxu0 0
        %1042 = vmatprep.subr.bf16.mxu0 0
        %1043 = vmatpush1.bf16.msra.mxu0 0
        %1044 = vmatprep.subr.bf16.mxu0 0
        %1045 = vmatpush1.bf16.msra.mxu0 0
        %1046 = vmatprep.subr.bf16.mxu0 0
        %1047 = vmatpush1.bf16.msra.mxu0 0
        %1048 = vmatprep.subr.bf16.mxu0 0
        %1049 = vmatpush1.bf16.msra.mxu0 0
        %1050 = vmatprep.subr.bf16.mxu0 0
        %1051 = vmatpush1.bf16.msra.mxu0 0
        %1052 = vmatprep.subr.bf16.mxu0 0
        %1053 = vmatpush1.bf16.msra.mxu0 0
        %1054 = vmatprep.subr.bf16.mxu0 0
        %1055 = vmatpush1.bf16.msra.mxu0 0
        %1056 = vmatprep.subr.bf16.mxu0 0
        %1057 = vmatpush1.bf16.msra.mxu0 0
        %1058 = vmatprep.subr.bf16.mxu0 0
        %1059 = vmatpush1.bf16.msra.mxu0 0
        %1060 = vmatprep.subr.bf16.mxu0 0
        %1061 = vmatpush1.bf16.msra.mxu0 0
        %1062 = vmatprep.mubr.bf16.mxu0 0
        %1063 = vmatmul.mubr.bf16.gmra.mrb[0].mxu0 %v1025
        %v1064 = vpop.f32.mrb[0].mxu0
        %v1065 = vadd.f32 0.0, %v1064
        %v1066 = vpop.f32.mrb[0].mxu0
        %v1067 = vpop.f32.mrb[0].mxu0
        %v1068 = vpop.f32.mrb[0].mxu0
        %1069 = vdwg.mxu0
        %p1070 = scmp.eq.s32.totalorder %s41, 0
        // Predicated region
        $region89: #{tpu_custom_call.1} parent=87 // pred_check
          %p1071 = pneg %p1070
        $region90: #{tpu_custom_call.1} parent=87 // pred_check_branch
          %1073 = sbr.rel (%p1071) target = $region92
        $region91: #{tpu_custom_call.1} parent=87 // pred_region
          %1074 = vst.msk [vmem:[#allocation2] sm:$0xff] %vm741, 0.0
        $region92: #{tpu_custom_call.1} parent=87 // pred_fallthru
          _
        %v1075 = vld [vmem:[#allocation2] sm:$0xff]
        %v1076 = vadd.f32 %v1075, %v1065
        %1077 = vst.msk [vmem:[#allocation2] sm:$0xff] %vm741, %v1076
        %p1078 = scmp.eq.s32.totalorder %s41, 3
        // Predicated region
        $region93: #{tpu_custom_call.1} parent=87 // pred_check
          %p1079 = pneg %p1078
        $region94: #{tpu_custom_call.1} parent=87 // pred_check_branch
          %1081 = sbr.rel (%p1079) target = $region96
        $region95: #{tpu_custom_call.1} parent=87 // pred_region
          %v1082 = vld [vmem:[#allocation2] sm:$0xff]
          %v1083 = vld [vmem:[%s8] sm:$0x1]
          %v1085 = vlaneseq
          %v1086 = vshrl.u32 %v1085, 7
          %v1087 = vsub.s32 0, %v1086
          %v1088 = vrot.slane %v1083, %v1087
          %v1090 = vadd.f32 %v1082, %v1088
          %v1091 = vadd.f32 %v1090, %v716
          %v1092 = vld [vmem:[%s9] sm:$0x1]
          %v1093 = vld [vmem:[%s10] sm:$0x1]
          %v1094 = vsel %vm741, %v1091, 0.0
          %1095 = vadd.xlane.f32.xlu0 %v1094
          %v1096 = vpop.xlane.xlu0 %1095
          %v1097 = vrcp.pop 32.0
          %v1098 = vmul.f32 %v1096, %v1097
          %v1099 = vsub.f32 %v1091, %v1098
          %v1100 = vmul.f32 %v1099, %v1099
          %v1101 = vsel %vm741, %v1100, 0.0
          %1102 = vadd.xlane.f32.xlu0 %v1101
          %v1103 = vpop.xlane.xlu0 %1102
          %v1104 = vmul.f32 %v1103, %v1097
          %v1105 = vadd.f32 %v1104, 1e-05
          %v1106 = vrsqrt.pop %v1105
          %v1107 = vmul.f32 %v1099, %v1106
          %v1109 = vlaneseq
          %v1110 = vshrl.u32 %v1109, 7
          %v1111 = vsub.s32 0, %v1110
          %v1112 = vrot.slane %v1092, %v1111
          %v1114 = vmul.f32 %v1107, %v1112
          %v1116 = vlaneseq
          %v1117 = vshrl.u32 %v1116, 7
          %v1118 = vsub.s32 0, %v1117
          %v1119 = vrot.slane %v1093, %v1118
          %v1121 = vadd.f32 %v1114, %v1119
          %v1122 = vpack.c.bf16 %v1121, %v1121
          %v1123 = vld [vmem:[%s11] sm:$0xf]
          %v1124 = vld [vmem:[%s11 + $0x4] sm:$0xf]
          %v1125 = vld [vmem:[%s11 + $0x8] sm:$0xf]
          %v1126 = vld [vmem:[%s11 + $0xc] sm:$0xf]
          %v1127 = vld [vmem:[%s12] sm:$0x1]
          %v1129 = vlaneseq
          %v1130 = vshrl.u32 %v1129, 7
          %v1131 = vsub.s32 0, %v1130
          %v1132 = vrot.slane %v1127, %v1131
          %v1138 = vunpack.c.l.b16 %v1123
          %v1139 = vunpack.c.l.b16 %v1124
          %v1140 = vunpack.c.l.b16 %v1125
          %v1141 = vunpack.c.l.b16 %v1126
          %v1142 = vpack.c.b16 %v1139, %v1138
          %v1143 = vpack.c.b16 %v1141, %v1140
          %v1147 = vsel %vm741, %v1122, 0
          %1149 = vmatprep.subr.bf16.mxu0 0
          %1150 = vmatpush1.bf16.msra.mxu0 %v1142
          %1151 = vmatprep.subr.bf16.mxu0 0
          %1152 = vmatpush1.bf16.msra.mxu0 %v1143
          %1153 = vmatprep.subr.bf16.mxu0 0
          %1154 = vmatpush1.bf16.msra.mxu0 0
          %1155 = vmatprep.subr.bf16.mxu0 0
          %1156 = vmatpush1.bf16.msra.mxu0 0
          %1157 = vmatprep.subr.bf16.mxu0 0
          %1158 = vmatpush1.bf16.msra.mxu0 0
          %1159 = vmatprep.subr.bf16.mxu0 0
          %1160 = vmatpush1.bf16.msra.mxu0 0
          %1161 = vmatprep.subr.bf16.mxu0 0
          %1162 = vmatpush1.bf16.msra.mxu0 0
          %1163 = vmatprep.subr.bf16.mxu0 0
          %1164 = vmatpush1.bf16.msra.mxu0 0
          %1165 = vmatprep.subr.bf16.mxu0 0
          %1166 = vmatpush1.bf16.msra.mxu0 0
          %1167 = vmatprep.subr.bf16.mxu0 0
          %1168 = vmatpush1.bf16.msra.mxu0 0
          %1169 = vmatprep.subr.bf16.mxu0 0
          %1170 = vmatpush1.bf16.msra.mxu0 0
          %1171 = vmatprep.subr.bf16.mxu0 0
          %1172 = vmatpush1.bf16.msra.mxu0 0
          %1173 = vmatprep.subr.bf16.mxu0 0
          %1174 = vmatpush1.bf16.msra.mxu0 0
          %1175 = vmatprep.subr.bf16.mxu0 0
          %1176 = vmatpush1.bf16.msra.mxu0 0
          %1177 = vmatprep.subr.bf16.mxu0 0
          %1178 = vmatpush1.bf16.msra.mxu0 0
          %1179 = vmatprep.subr.bf16.mxu0 0
          %1180 = vmatpush1.bf16.msra.mxu0 0
          %1181 = vmatprep.mubr.bf16.mxu0 0
          %1182 = vmatmul.mubr.bf16.gmra.mrb[0].mxu0 %v1147
          %v1183 = vpop.f32.mrb[0].mxu0
          %v1184 = vadd.f32 %v1132, %v1183
          %v1185 = vpop.f32.mrb[0].mxu0
          %v1186 = vpop.f32.mrb[0].mxu0
          %v1187 = vpop.f32.mrb[0].mxu0
          %1188 = vdwg.mxu0
          %v1189 = vmax.f32 %v1184, 0.0
          %v1190 = vpack.c.bf16 %v1189, %v1189
          %v1191 = vld [vmem:[%s13] sm:$0xf]
          %v1192 = vld [vmem:[%s13 + $0x4] sm:$0xf]
          %v1193 = vld [vmem:[%s13 + $0x8] sm:$0xf]
          %v1194 = vld [vmem:[%s13 + $0xc] sm:$0xf]
          %v1195 = vld [vmem:[%s13 + $0x10] sm:$0xf]
          %v1196 = vld [vmem:[%s13 + $0x14] sm:$0xf]
          %v1197 = vld [vmem:[%s13 + $0x18] sm:$0xf]
          %v1198 = vld [vmem:[%s13 + $0x1c] sm:$0xf]
          %v1199 = vld [vmem:[%s14] sm:$0x1]
          %v1201 = vlaneseq
          %v1202 = vshrl.u32 %v1201, 7
          %v1203 = vsub.s32 0, %v1202
          %v1204 = vrot.slane %v1199, %v1203
          %v1214 = vunpack.c.l.b16 %v1191
          %v1215 = vunpack.c.l.b16 %v1192
          %v1216 = vunpack.c.l.b16 %v1193
          %v1217 = vunpack.c.l.b16 %v1194
          %v1218 = vunpack.c.l.b16 %v1195
          %v1219 = vunpack.c.l.b16 %v1196
          %v1220 = vunpack.c.l.b16 %v1197
          %v1221 = vunpack.c.l.b16 %v1198
          %v1222 = vpack.c.b16 %v1215, %v1214
          %v1223 = vpack.c.b16 %v1217, %v1216
          %v1224 = vpack.c.b16 %v1219, %v1218
          %v1225 = vpack.c.b16 %v1221, %v1220
          %vm1230 = vcmask 523264
          %v1232 = vsel %vm1230, %v1190, 0
          %1234 = vmatprep.subr.bf16.mxu0 0
          %1235 = vmatpush1.bf16.msra.mxu0 %v1222
          %1236 = vmatprep.subr.bf16.mxu0 0
          %1237 = vmatpush1.bf16.msra.mxu0 %v1223
          %1238 = vmatprep.subr.bf16.mxu0 0
          %1239 = vmatpush1.bf16.msra.mxu0 %v1224
          %1240 = vmatprep.subr.bf16.mxu0 0
          %1241 = vmatpush1.bf16.msra.mxu0 %v1225
          %1242 = vmatprep.subr.bf16.mxu0 0
          %1243 = vmatpush1.bf16.msra.mxu0 0
          %1244 = vmatprep.subr.bf16.mxu0 0
          %1245 = vmatpush1.bf16.msra.mxu0 0
          %1246 = vmatprep.subr.bf16.mxu0 0
          %1247 = vmatpush1.bf16.msra.mxu0 0
          %1248 = vmatprep.subr.bf16.mxu0 0
          %1249 = vmatpush1.bf16.msra.mxu0 0
          %1250 = vmatprep.subr.bf16.mxu0 0
          %1251 = vmatpush1.bf16.msra.mxu0 0
          %1252 = vmatprep.subr.bf16.mxu0 0
          %1253 = vmatpush1.bf16.msra.mxu0 0
          %1254 = vmatprep.subr.bf16.mxu0 0
          %1255 = vmatpush1.bf16.msra.mxu0 0
          %1256 = vmatprep.subr.bf16.mxu0 0
          %1257 = vmatpush1.bf16.msra.mxu0 0
          %1258 = vmatprep.subr.bf16.mxu0 0
          %1259 = vmatpush1.bf16.msra.mxu0 0
          %1260 = vmatprep.subr.bf16.mxu0 0
          %1261 = vmatpush1.bf16.msra.mxu0 0
          %1262 = vmatprep.subr.bf16.mxu0 0
          %1263 = vmatpush1.bf16.msra.mxu0 0
          %1264 = vmatprep.subr.bf16.mxu0 0
          %1265 = vmatpush1.bf16.msra.mxu0 0
          %1266 = vmatprep.mubr.bf16.mxu0 0
          %1267 = vmatmul.mubr.bf16.gmra.mrb[0].mxu0 %v1232
          %v1268 = vpop.f32.mrb[0].mxu0
          %v1269 = vadd.f32 %v1204, %v1268
          %v1270 = vpop.f32.mrb[0].mxu0
          %v1271 = vpop.f32.mrb[0].mxu0
          %v1272 = vpop.f32.mrb[0].mxu0
          %1273 = vdwg.mxu0
          %v1274 = vadd.f32 %v1269, %v1121
          %v1275 = vld [vmem:[%s15] sm:$0x1]
          %v1276 = vld [vmem:[%s16] sm:$0x1]
          %v1277 = vsel %vm741, %v1274, 0.0
          %1278 = vadd.xlane.f32.xlu0 %v1277
          %v1279 = vpop.xlane.xlu0 %1278
          %v1280 = vmul.f32 %v1279, %v1097
          %v1281 = vsub.f32 %v1274, %v1280
          %v1282 = vmul.f32 %v1281, %v1281
          %v1283 = vsel %vm741, %v1282, 0.0
          %1284 = vadd.xlane.f32.xlu0 %v1283
          %v1285 = vpop.xlane.xlu0 %1284
          %v1286 = vmul.f32 %v1285, %v1097
          %v1287 = vadd.f32 %v1286, 1e-05
          %v1288 = vrsqrt.pop %v1287
          %v1289 = vmul.f32 %v1281, %v1288
          %v1291 = vlaneseq
          %v1292 = vshrl.u32 %v1291, 7
          %v1293 = vsub.s32 0, %v1292
          %v1294 = vrot.slane %v1275, %v1293
          %v1296 = vmul.f32 %v1289, %v1294
          %v1298 = vlaneseq
          %v1299 = vshrl.u32 %v1298, 7
          %v1300 = vsub.s32 0, %v1299
          %v1301 = vrot.slane %v1276, %v1300
          %v1303 = vadd.f32 %v1296, %v1301
          %1304 = vst.msk [vmem:[%s675] sm:$0xff] %vm741, %v1303
        $region96: #{tpu_custom_call.1} parent=87 // pred_fallthru
          _
        %s1305 = sand.u32 %s453, 1
        %s1306 = scalar_lea.sflag [#allocation4], %s1305
        %s1307 = sand.u32 %s453, 1
        %s1308 = smul.addr %s1307, 8
        %s1309 = scalar_lea.vmem [#allocation3], %s1308
        %s1310 = sand.u32 %s481, 1
        %s1311 = scalar_lea.sflag [#allocation6], %s1310
        %s1312 = sand.u32 %s481, 1
        %s1313 = smul.addr %s1312, 8
        %s1314 = scalar_lea.vmem [#allocation5], %s1313
        // Predicated region
        $region97: #{tpu_custom_call.1} parent=87 // pred_check
          %p1315 = pneg %p463
        $region98: #{tpu_custom_call.1} parent=87 // pred_check_branch
          %1317 = sbr.rel (%p1315) target = $region100
        $region99: #{tpu_custom_call.1} parent=87 // pred_region
          %s1319 = ssub.s32 128, 128
          %1320 = vsyncadd %s1306, %s1319
          %s1321 = smul.addr %s40, 128
          %s1322 = scalar_lea.hbm %s17, %s1321
          %s1324 = sshll.u32 %s1309, 4
          %s1325 = int_to_ptr.vmem [resolvable:$true] %s1324
          %1327 = dma.vmem_to_hbm [thread:$0]  %s1325, 128, %s1322, %s1306
        $region100: #{tpu_custom_call.1} parent=87 // pred_fallthru
          _
        // Predicated region
        $region101: #{tpu_custom_call.1} parent=87 // pred_check
          %p1328 = pneg %p491
        $region102: #{tpu_custom_call.1} parent=87 // pred_check_branch
          %1330 = sbr.rel (%p1328) target = $region104
        $region103: #{tpu_custom_call.1} parent=87 // pred_region
          %s1332 = ssub.s32 128, 128
          %1333 = vsyncadd %s1311, %s1332
          %s1334 = smul.addr %s41, 2
          %s1335 = sadd.s32 %s40, %s1334
          %s1336 = smul.addr %s1335, 128
          %s1337 = scalar_lea.hbm %s18, %s1336
          %s1339 = sshll.u32 %s1314, 4
          %s1340 = int_to_ptr.vmem [resolvable:$true] %s1339
          %1342 = dma.vmem_to_hbm [thread:$0]  %s1340, 128, %s1337, %s1311
        $region104: #{tpu_custom_call.1} parent=87 // pred_fallthru
          _
      $region88: #{tpu_custom_call.1} parent=5 // pred_fallthru
        _
      %p1343 = scmp.le.s32.totalorder 2, %s31
      // Predicated region
      $region105: #{tpu_custom_call.1} parent=5 // pred_check
        %p1344 = pneg %p1343
      $region106: #{tpu_custom_call.1} parent=5 // pred_check_branch
        %1346 = sbr.rel (%p1344) target = $region108
      $region107: #{tpu_custom_call.1} parent=5 // pred_region
        %s1347 = ssub.s32 %s31, 2
        // Predicated region
        $region109: #{tpu_custom_call.1} parent=107 // pred_check
          %p1348 = pneg %p469
        $region110: #{tpu_custom_call.1} parent=107 // pred_check_branch
          %1350 = sbr.rel (%p1348) target = $region112
        $region111: #{tpu_custom_call.1} parent=107 // pred_region
          %s1351 = sand.u32 %s454, 1
          %s1352 = scalar_lea.sflag [#allocation4], %s1351
          %s1353 = sand.u32 %s454, 1
          %s1354 = smul.addr %s1353, 8
          %s1355 = scalar_lea.vmem [#allocation3], %s1354
          %1356 = dma.done %s1352, 128
        $region112: #{tpu_custom_call.1} parent=107 // pred_fallthru
          _
        // Predicated region
        $region113: #{tpu_custom_call.1} parent=107 // pred_check
          %p1357 = pneg %p497
        $region114: #{tpu_custom_call.1} parent=107 // pred_check_branch
          %1359 = sbr.rel (%p1357) target = $region116
        $region115: #{tpu_custom_call.1} parent=107 // pred_region
          %s1360 = sand.u32 %s482, 1
          %s1361 = scalar_lea.sflag [#allocation6], %s1360
          %s1362 = sand.u32 %s482, 1
          %s1363 = smul.addr %s1362, 8
          %s1364 = scalar_lea.vmem [#allocation5], %s1363
          %1365 = dma.done %s1361, 128
        $region116: #{tpu_custom_call.1} parent=107 // pred_fallthru
          _
      $region108: #{tpu_custom_call.1} parent=5 // pred_fallthru
        _
    $region6: #{tpu_custom_call.1} parent=1 // loop_footer
      %s35 = sadd.s32 1, %s31
    $region7: #{tpu_custom_call.1} parent=1 // loop_footer_branch
      %30 = sbr.rel target = $region3
    $region8: #{tpu_custom_call.1} parent=1 // loop_exit
      _
    %1366 = vsyncpa [#allocation4], 1
    %s1367 = scalar_lea.sflag [#allocation4], 1
    %1368 = vsyncpa %s1367, 1
    %1369 = vsyncpa [#allocation6], 1
    %s1370 = scalar_lea.sflag [#allocation6], 1
    %1371 = vsyncpa %s1370, 1

</llo_original>
